<compile_context>
chip_gen: v7x
topology: tpu7x:2x2x1
jax: 0.10.0
libtpu: 0.0.40
codegen_flags: <defaults>
</compile_context>

<pallas_src>
import functools

import numpy as np
import jax
import jax.numpy as jnp
from jax import lax
from jax.experimental import pallas as pl
from jax.experimental.pallas import tpu as pltpu


# ----------------------------------------------------------------------------
# Fused Pallas kernel: one grid step = (one input stream) x (one image tile).
# preprocess (ReLU-Conv1x1-BN) -> ops1 branch -> ops2 (maxpool+BN) branch,
# all on VMEM-resident values; one 128-lane-dense store per step.
# ----------------------------------------------------------------------------
def _gdas_cell_kernel(x_ref, wpre_ref, bpre_ref, wa_ref, wb_ref, wc_ref,
                      vecs_ref, tsel_ref, o_ref, hbuf_ref, *, Ho, WoC, C):
    f32 = jnp.float32
    NH = x_ref.shape[1]            # rows in this tile = images_per_tile * H
    NHo = NH // 2
    cdt = wpre_ref.dtype           # matmul operand dtype (f32 or bf16)

    def mm(a, b):                  # MXU dot, f32 accumulation
        return jnp.dot(a.astype(cdt), b, preferred_element_type=f32)

    # ---- preprocess: ReLU -> 1x1 conv (BN scale folded) + BN bias ----------
    x = x_ref[0]                                               # (NH, W*Cin)
    p = mm(jnp.maximum(x, 0.0), wpre_ref[0]) + bpre_ref[0]     # (NH, W*C) f32

    vecs = vecs_ref[0]                                         # (4, Wo*C) f32
    b1, b2 = vecs[0:1, :], vecs[1:2, :]
    pool_s, pool_b = vecs[2:3, :], vecs[3:4, :]

    # rows whose h = 2*ho - 1 tap is out of range (ho == 0 within each image)
    row = lax.broadcasted_iota(jnp.int32, (NHo, 1), 0)
    first_row = (row % Ho) == 0                                # (NHo, 1) bool

    def h_taps(fill):
        """Even/odd-h rows of the staged buffer via strided sublane loads;
        the h = 2*ho-1 tap is a sublane roll of the odd rows with per-image
        boundary fill (0 for the conv, -1e30 for the pool)."""
        even = hbuf_ref[pl.ds(0, NHo, 2), :]                   # h = 2*ho
        odd = hbuf_ref[pl.ds(1, NHo, 2), :]                    # h = 2*ho + 1
        tap0 = jnp.where(first_row, fill,
                         pltpu.roll(odd, shift=1, axis=0))     # h = 2*ho - 1
        return tap0, even, odd

    # ---- ops1: ReLU -> conv(1,3) s(1,2) g8 -> conv(3,1) s(2,1) g8 -> BN
    #            -> ReLU -> conv1x1 -> BN ------------------------------------
    hbuf_ref[...] = mm(jnp.maximum(p, 0.0), wa_ref[0])         # (NH, Wo*C)
    t0, t1, t2 = h_taps(0.0)
    taps = jnp.concatenate([t0, t1, t2], axis=-1)              # (NHo, 3*Wo*C)
    r = mm(taps, wb_ref[0]) + b1                               # (3,1) conv + BN1
    x_ops = mm(jnp.maximum(r, 0.0), wc_ref[0]) + b2            # 1x1 conv + BN2

    # ---- ops2: MaxPool(3, stride 2, pad 1) -> BN ----------------------------
    NEG = jnp.float32(-1e30)       # sentinel kept in f32
    pw3 = mm(p, tsel_ref[...])                                 # (NH, 3*Wo*C)
    lane = lax.broadcasted_iota(jnp.int32, (1, WoC), 1)
    w_m1 = jnp.where(lane < C, NEG, pw3[:, 0:WoC])             # w=2wo-1 (wo==0 OOB)
    pw = jnp.maximum(jnp.maximum(w_m1, pw3[:, WoC:2 * WoC]),
                     pw3[:, 2 * WoC:3 * WoC])                  # (NH, Wo*C)
    hbuf_ref[...] = pw
    p0, p1, p2 = h_taps(NEG)
    pooled = jnp.maximum(jnp.maximum(p0, p1), p2)              # (NHo, Wo*C)
    x_pool = pooled * pool_s + pool_b

    # single 128-lane-dense store: [ops branch | pool branch]
    o_ref[0] = jnp.concatenate([x_ops, x_pool], axis=-1)


# ----------------------------------------------------------------------------
# BN folding and structured ("slab") weight construction — done once, offline.
# ----------------------------------------------------------------------------
def bn_fold(gamma, beta, mean, var, eps=1e-5):
    scale = gamma / jnp.sqrt(var + eps)
    return scale, beta - mean * scale


def _grouped_tap_blockdiag(w_tap, groups):
    """Single-tap grouped conv weight (Cout, Cin/groups) -> dense (Cin, Cout)
    block-diagonal matrix (zero outside the groups)."""
    w = np.asarray(w_tap, np.float32)
    Cout, Cg = w.shape
    og = Cout // groups
    m = np.zeros((Cg * groups, Cout), np.float32)
    for g in range(groups):
        m[g * Cg:(g + 1) * Cg, g * og:(g + 1) * og] = w[g * og:(g + 1) * og, :].T
    return m


def _build_wa_slab(wa, groups, W, C):
    """Grouped (1,3) conv, stride (1,2), pad (0,1) as a lane-merged (w,c) slab
    matrix of shape (W*C, Wo*C)."""
    Wo = W // 2
    wa = np.asarray(wa, np.float32)
    taps = [_grouped_tap_blockdiag(wa[:, :, 0, t], groups) for t in range(3)]
    m = np.zeros((W * C, Wo * C), np.float32)
    for wo in range(Wo):
        for t in range(3):
            w_in = 2 * wo + t - 1
            if 0 <= w_in < W:
                m[w_in * C:(w_in + 1) * C, wo * C:(wo + 1) * C] = taps[t]
    return m


def _build_wb_stacked(wb, groups, Wo, C, scale1):
    """Grouped (3,1) conv: the three H-tap channel mixers (BN1 scale folded,
    block diagonal over wo) stacked along rows -> (3*Wo*C, Wo*C).  Row order
    matches the in-kernel tap concat order [h=2ho-1, h=2ho, h=2ho+1]."""
    wb = np.asarray(wb, np.float32)
    s1 = np.asarray(scale1, np.float32)
    eye = np.eye(Wo, dtype=np.float32)
    mats = []
    for t in range(3):
        bd = _grouped_tap_blockdiag(wb[:, :, t, 0], groups) * s1[None, :]
        mats.append(np.kron(eye, bd))
    return np.concatenate(mats, axis=0)


def _build_1x1_slab(w, scale, cin_pad, reps):
    """1x1 conv (Cout, Cin, 1, 1) with folded per-channel scale, replicated
    over `reps` merged spatial positions -> (reps*cin_pad, reps*Cout).
    NOTE: kron density is 1/reps; for much larger W, chunk over W instead."""
    w = np.asarray(w, np.float32)
    scale = np.asarray(scale, np.float32)
    cin = w.shape[1]
    m = w[:, :, 0, 0].T * scale[None, :]
    m = np.pad(m, ((0, cin_pad - cin), (0, 0)))
    return np.kron(np.eye(reps, dtype=np.float32), m)


def _build_pool_wsel(W, C):
    """Fused W-tap selection for MaxPool: (W*C, 3*Wo*C) 0/1 matrix; column slab
    dw picks input column w = 2*wo + dw - 1 (out-of-range taps -> zero cols)."""
    Wo = W // 2
    m = np.zeros((W * C, 3 * Wo * C), np.float32)
    eye_c = np.eye(C, dtype=np.float32)
    for dw in range(3):
        for wo in range(Wo):
            w = 2 * wo + dw - 1
            if 0 <= w < W:
                m[w * C:(w + 1) * C,
                  dw * Wo * C + wo * C:dw * Wo * C + (wo + 1) * C] = eye_c
    return m


def pack_cell(params, W, groups=8, dtype=jnp.float32):
    """Fold all BatchNorms and pack every weight of the cell into the slab /
    selection-matrix form consumed by the fused kernel (runs once).  Matmul
    operands are stored in `dtype` (f32 or bf16); biases stay f32 since they
    are added to f32 accumulators.  Independent of N and H."""
    C = params['pre0_w'].shape[0]
    Wo = W // 2
    cin_max = max(params['pre0_w'].shape[1], params['pre1_w'].shape[1])

    def pack_stream(pre_w, pre_bn, ops1, pool_bn):
        sc, bi = bn_fold(*pre_bn)
        wpre = _build_1x1_slab(pre_w, sc, cin_max, W)
        bpre = np.tile(np.asarray(bi, np.float32), W)[None, :]
        wa = _build_wa_slab(ops1['wa'], groups, W, C)
        sc1, bi1 = bn_fold(*ops1['bn1'])
        wb = _build_wb_stacked(ops1['wb'], groups, Wo, C, sc1)
        sc2, bi2 = bn_fold(*ops1['bn2'])
        wc = _build_1x1_slab(ops1['wc'], sc2, C, Wo)
        scp, bip = bn_fold(*pool_bn)
        vecs = np.stack([np.tile(np.asarray(bi1, np.float32), Wo),
                         np.tile(np.asarray(bi2, np.float32), Wo),
                         np.tile(np.asarray(scp, np.float32), Wo),
                         np.tile(np.asarray(bip, np.float32), Wo)], axis=0)
        return wpre, bpre, wa, wb, wc, vecs

    st0 = pack_stream(params['pre0_w'], params['pre0_bn'],
                      params['ops1_0'], params['ops2_0_bn'])
    st1 = pack_stream(params['pre1_w'], params['pre1_bn'],
                      params['ops1_1'], params['ops2_1_bn'])

    def stack(i):
        return np.stack([st0[i], st1[i]])

    return {
        'wpre': jnp.asarray(stack(0), dtype),        # (2, W*cin_max, W*C)
        'bpre': jnp.asarray(stack(1), jnp.float32),  # (2, 1, W*C)
        'wa':   jnp.asarray(stack(2), dtype),        # (2, W*C, Wo*C)
        'wb':   jnp.asarray(stack(3), dtype),        # (2, 3*Wo*C, Wo*C)
        'wc':   jnp.asarray(stack(4), dtype),        # (2, Wo*C, Wo*C)
        'vecs': jnp.asarray(stack(5), jnp.float32),  # (2, 4, Wo*C)
        'tsel': jnp.asarray(_build_pool_wsel(W, C), dtype),  # (W*C, 3*Wo*C)
    }


# ----------------------------------------------------------------------------
# Forward (single fused pallas_call, grid = streams x image-tiles)
# ----------------------------------------------------------------------------
@functools.partial(jax.jit, static_argnames=("images_per_tile",))
def gdas_reduction_cell_apply(packed, s0_nchw, s1_nchw, *, images_per_tile=None):
    N, _, H, W = s0_nchw.shape
    assert H % 2 == 0 and W % 2 == 0, "even H/W required (reduction cell)"
    Ho, Wo = H // 2, W // 2
    cin_max = packed['wpre'].shape[1] // W
    C = packed['wpre'].shape[2] // W
    WoC = Wo * C

    # Row tiling over whole images: (3,1)-conv / pool H taps never cross a
    # tile boundary, so no halo DMA is needed.
    if images_per_tile is None:
        images_per_tile = 1
        for d in range(N, 0, -1):
            if N % d == 0 and d * H <= 1024:      # keep activation block modest
                images_per_tile = d
                break
    assert N % images_per_tile == 0
    n_tiles = N // images_per_tile
    NH_t, NHo_t = images_per_tile * H, images_per_tile * Ho
    if n_tiles > 1:
        assert NH_t % 8 == 0 and NHo_t % 8 == 0, "tile rows must be 8-aligned"

    def to_slab(x_nchw):
        x = jnp.transpose(x_nchw, (0, 2, 3, 1)).astype(jnp.float32)   # NHWC
        x = jnp.pad(x, ((0, 0), (0, 0), (0, 0), (0, cin_max - x.shape[-1])))
        return x.reshape(N * H, W * cin_max)

    x_all = jnp.stack([to_slab(s0_nchw), to_slab(s1_nchw)])   # (2, N*H, W*cin)

    flops_tile = 2 * (NH_t * (W * cin_max) * (W * C)      # preprocess 1x1
                      + NH_t * (W * C) * WoC              # conv (1,3)
                      + NHo_t * (3 * WoC) * WoC           # conv (3,1), fused taps
                      + NHo_t * WoC * WoC                 # 1x1 conv
                      + NH_t * (W * C) * (3 * WoC))       # pool W taps, fused
    flops = 2 * n_tiles * flops_tile
    bytes_accessed = (int(x_all.size) * x_all.dtype.itemsize
                      + sum(int(v.size) * v.dtype.itemsize for v in packed.values())
                      + 2 * N * Ho * 2 * WoC * 4)

    kern = functools.partial(_gdas_cell_kernel, Ho=Ho, WoC=WoC, C=C)

    out = pl.pallas_call(
        kern,
        out_shape=jax.ShapeDtypeStruct((2, N * Ho, 2 * WoC), jnp.float32),
        grid=(2, n_tiles),
        in_specs=[
            pl.BlockSpec((1, NH_t, W * cin_max), lambda i, j: (i, j, 0)),
            pl.BlockSpec((1, W * cin_max, W * C), lambda i, j: (i, 0, 0)),
            pl.BlockSpec((1, 1, W * C), lambda i, j: (i, 0, 0)),
            pl.BlockSpec((1, W * C, WoC), lambda i, j: (i, 0, 0)),
            pl.BlockSpec((1, 3 * WoC, WoC), lambda i, j: (i, 0, 0)),
            pl.BlockSpec((1, WoC, WoC), lambda i, j: (i, 0, 0)),
            pl.BlockSpec((1, 4, WoC), lambda i, j: (i, 0, 0)),
            pl.BlockSpec((W * C, 3 * WoC), lambda i, j: (0, 0)),
        ],
        out_specs=pl.BlockSpec((1, NHo_t, 2 * WoC), lambda i, j: (i, j, 0)),
        scratch_shapes=[pltpu.VMEM((NH_t, WoC), jnp.float32)],
        compiler_params=pltpu.CompilerParams(
            dimension_semantics=("parallel", "parallel")),
        cost_estimate=pl.CostEstimate(flops=int(flops), transcendentals=0,
                                      bytes_accessed=int(bytes_accessed)),
    )(x_all, packed['wpre'], packed['bpre'], packed['wa'], packed['wb'],
      packed['wc'], packed['vecs'], packed['tsel'])

    # Decode to NCHW [X0, X1, X2, X3] only to match the PyTorch module output;
    # a fused consumer should take the lane-dense (2, N*Ho, 2*Wo*C) slab as-is.
    out = out.reshape(2, N, Ho, 2, Wo, C)
    y = jnp.concatenate([out[0, :, :, 0], out[1, :, :, 0],
                         out[0, :, :, 1], out[1, :, :, 1]], axis=-1)
    return jnp.transpose(y, (0, 3, 1, 2))


# ----------------------------------------------------------------------------
# Deterministic parameter init (shapes from the module __init__; affine=True)
# ----------------------------------------------------------------------------
def init_bn(key, C):
    k1, k2, k3, k4 = jax.random.split(key, 4)
    gamma = (1.0 + 0.1 * jax.random.normal(k1, (C,))).astype(jnp.float32)
    beta = (0.1 * jax.random.normal(k2, (C,))).astype(jnp.float32)
    mean = (0.1 * jax.random.normal(k3, (C,))).astype(jnp.float32)
    var = jax.random.uniform(k4, (C,), minval=0.5, maxval=1.5).astype(jnp.float32)
    return (gamma, beta, mean, var)


def init_params(key, C_prev_prev, C_prev, C):
    ks = jax.random.split(key, 16)

    def w(k, shape):
        return (0.2 * jax.random.normal(k, shape)).astype(jnp.float32)

    return {
        'pre0_w': w(ks[0], (C, C_prev_prev, 1, 1)), 'pre0_bn': init_bn(ks[1], C),
        'pre1_w': w(ks[2], (C, C_prev, 1, 1)),      'pre1_bn': init_bn(ks[3], C),
        'ops1_0': {
            'wa': w(ks[4], (C, C // 8, 1, 3)),
            'wb': w(ks[5], (C, C // 8, 3, 1)),
            'bn1': init_bn(ks[6], C),
            'wc': w(ks[7], (C, C, 1, 1)),
            'bn2': init_bn(ks[8], C),
        },
        'ops1_1': {
            'wa': w(ks[9], (C, C // 8, 1, 3)),
            'wb': w(ks[10], (C, C // 8, 3, 1)),
            'bn1': init_bn(ks[11], C),
            'wc': w(ks[12], (C, C, 1, 1)),
            'bn2': init_bn(ks[13], C),
        },
        'ops2_0_bn': init_bn(ks[14], C),
        'ops2_1_bn': init_bn(ks[15], C),
    }


# ----------------------------------------------------------------------------
# Pure-JAX reference (lax conv / reduce_window) for correctness checking
# ----------------------------------------------------------------------------
def _conv_ref(x, w, stride, padding, groups=1):
    return lax.conv_general_dilated(
        x, jnp.transpose(w, (2, 3, 1, 0)),
        window_strides=stride,
        padding=[(padding[0], padding[0]), (padding[1], padding[1])],
        dimension_numbers=('NHWC', 'HWIO', 'NHWC'),
        feature_group_count=groups)


def _bn_ref(x, bn):
    sc, bi = bn_fold(*bn)
    return x * sc + bi


def _maxpool_ref(x):
    return lax.reduce_window(x, -jnp.inf, lax.max,
                             (1, 3, 3, 1), (1, 2, 2, 1),
                             ((0, 0), (1, 1), (1, 1), (0, 0)))


def reference_forward(params, s0_nchw, s1_nchw):
    s0 = jnp.transpose(s0_nchw, (0, 2, 3, 1))
    s1 = jnp.transpose(s1_nchw, (0, 2, 3, 1))
    p0 = _bn_ref(_conv_ref(jax.nn.relu(s0), params['pre0_w'], (1, 1), (0, 0)),
                 params['pre0_bn'])
    p1 = _bn_ref(_conv_ref(jax.nn.relu(s1), params['pre1_w'], (1, 1), (0, 0)),
                 params['pre1_bn'])

    def branch(x, prm):
        y = _conv_ref(jax.nn.relu(x), prm['wa'], (1, 2), (0, 1), groups=8)
        y = _conv_ref(y, prm['wb'], (2, 1), (1, 0), groups=8)
        y = _bn_ref(y, prm['bn1'])
        y = _conv_ref(jax.nn.relu(y), prm['wc'], (1, 1), (0, 0))
        return _bn_ref(y, prm['bn2'])

    X0 = branch(p0, params['ops1_0'])
    X1 = branch(p1, params['ops1_1'])
    X2 = _bn_ref(_maxpool_ref(p0), params['ops2_0_bn'])
    X3 = _bn_ref(_maxpool_ref(p1), params['ops2_1_bn'])
    out = jnp.concatenate([X0, X1, X2, X3], axis=-1)
    return jnp.transpose(out, (0, 3, 1, 2))


# ----------------------------------------------------------------------------
if __name__ == "__main__":
    # TODO(synk): drop_path (training-only stochastic depth) is a no-op in eval
    # mode and is intentionally not implemented.
    N, C_prev_prev, C_prev, C, H, W = 2, 8, 8, 8, 16, 16   # C % 8 == 0 (groups=8)

    key = jax.random.PRNGKey(0)
    k0, k1 = jax.random.split(key)
    s0 = jax.random.normal(k0, (N, C_prev_prev, H, W), jnp.float32)
    s1 = jax.random.normal(k1, (N, C_prev, H, W), jnp.float32)

    params = init_params(jax.random.PRNGKey(42), C_prev_prev, C_prev, C)
    ref = jax.block_until_ready(reference_forward(params, s0, s1))

    # f32 weight slabs: strict check; also exercises the row-tiling grid axis.
    packed_f32 = pack_cell(params, W=W, groups=8, dtype=jnp.float32)
    out = jax.block_until_ready(
        gdas_reduction_cell_apply(packed_f32, s0, s1, images_per_tile=1))
    assert out.shape == (N, 4 * C, H // 2, W // 2), out.shape
    err = float(np.max(np.abs(np.asarray(out) - np.asarray(ref))))
    assert np.allclose(np.asarray(out), np.asarray(ref), atol=1e-4, rtol=1e-4), err

    # bf16 matmul operands (MXU-native on v6e/v7x): selection slabs are exact
    # in bf16; real-weight dots lose ~0.4% relative -> loose tolerance.
    packed_bf16 = pack_cell(params, W=W, groups=8, dtype=jnp.bfloat16)
    out_bf16 = jax.block_until_ready(
        gdas_reduction_cell_apply(packed_bf16, s0, s1))
    err_bf16 = float(np.max(np.abs(np.asarray(out_bf16) - np.asarray(ref))))
    assert np.allclose(np.asarray(out_bf16), np.asarray(ref),
                       atol=1e-1, rtol=1e-1), err_bf16

    print("KERNEL_OK")
</pallas_src>

<mosaic_0001>
module attributes {stable_mosaic.version = 11 : i64} {
  func.func @_gdas_cell_kernel(%arg0: i32, %arg1: i32, %arg2: memref<1x16x128xf32, #tpu.memory_space<vmem>>, %arg3: memref<1x128x128xf32, #tpu.memory_space<vmem>>, %arg4: memref<1x1x128xf32, #tpu.memory_space<vmem>>, %arg5: memref<1x128x64xf32, #tpu.memory_space<vmem>>, %arg6: memref<1x192x64xf32, #tpu.memory_space<vmem>>, %arg7: memref<1x64x64xf32, #tpu.memory_space<vmem>>, %arg8: memref<1x4x64xf32, #tpu.memory_space<vmem>>, %arg9: memref<128x192xf32, #tpu.memory_space<vmem>>, %arg10: memref<1x8x128xf32, #tpu.memory_space<vmem>>, %arg11: memref<16x64xf32, #tpu.memory_space<vmem>>) attributes {dimension_semantics = [#tpu.dimension_semantics<parallel>, #tpu.dimension_semantics<parallel>], iteration_bounds = array<i64: 2, 2>, scalar_prefetch = 0 : i64, scratch_operands = 1 : i64, tpu.core_type = #tpu.core_type<tc>, window_params = [{transform_indices = @transform_0, window_bounds = array<i64: 1, 16, 128>}, {transform_indices = @transform_1, window_bounds = array<i64: 1, 128, 128>}, {transform_indices = @transform_2, window_bounds = array<i64: 1, 1, 128>}, {transform_indices = @transform_3, window_bounds = array<i64: 1, 128, 64>}, {transform_indices = @transform_4, window_bounds = array<i64: 1, 192, 64>}, {transform_indices = @transform_5, window_bounds = array<i64: 1, 64, 64>}, {transform_indices = @transform_6, window_bounds = array<i64: 1, 4, 64>}, {pipeline_mode = #tpu.pipeline_mode<synchronous>, transform_indices = @transform_7, window_bounds = array<i64: 128, 192>}, {transform_indices = @transform_8, window_bounds = array<i64: 1, 8, 128>}]} {
    %c0 = arith.constant 0 : index
    %c0_0 = arith.constant 0 : index
    %c0_1 = arith.constant 0 : index
    %0 = vector.load %arg2[%c0, %c0_0, %c0_1] : memref<1x16x128xf32, #tpu.memory_space<vmem>>, vector<1x16x128xf32>
    %1 = vector.shape_cast %0 : vector<1x16x128xf32> to vector<16x128xf32>
    %cst = arith.constant 0.000000e+00 : f32
    %2 = vector.broadcast %cst : f32 to vector<16x128xf32>
    %3 = arith.maximumf %1, %2 : vector<16x128xf32>
    %c0_2 = arith.constant 0 : index
    %c0_3 = arith.constant 0 : index
    %c0_4 = arith.constant 0 : index
    %4 = vector.load %arg3[%c0_2, %c0_3, %c0_4] : memref<1x128x128xf32, #tpu.memory_space<vmem>>, vector<1x128x128xf32>
    %5 = vector.shape_cast %4 : vector<1x128x128xf32> to vector<128x128xf32>
    %cst_5 = arith.constant dense<0.000000e+00> : vector<16x128xf32>
    %6 = tpu.matmul %3, %5, %cst_5 {dimension_numbers = #tpu.dot_dimension_numbers<[1], [0], [0], [1], [0, 0, 1, 1], [], []>} : vector<16x128xf32>, vector<128x128xf32>, vector<16x128xf32> -> vector<16x128xf32>
    %c0_6 = arith.constant 0 : index
    %c0_7 = arith.constant 0 : index
    %c0_8 = arith.constant 0 : index
    %7 = vector.load %arg4[%c0_6, %c0_7, %c0_8] : memref<1x1x128xf32, #tpu.memory_space<vmem>>, vector<1x1x128xf32>
    %8 = vector.shape_cast %7 : vector<1x1x128xf32> to vector<1x128xf32>
    %9 = vector.broadcast %8 : vector<1x128xf32> to vector<16x128xf32>
    %10 = arith.addf %6, %9 : vector<16x128xf32>
    %c0_9 = arith.constant 0 : index
    %c0_10 = arith.constant 0 : index
    %c0_11 = arith.constant 0 : index
    %11 = vector.load %arg8[%c0_9, %c0_10, %c0_11] : memref<1x4x64xf32, #tpu.memory_space<vmem>>, vector<1x4x64xf32>
    %12 = vector.shape_cast %11 : vector<1x4x64xf32> to vector<4x64xf32>
    %13 = vector.extract_strided_slice %12 {offsets = [0, 0], sizes = [1, 64], strides = [1, 1]} : vector<4x64xf32> to vector<1x64xf32>
    %14 = vector.extract_strided_slice %12 {offsets = [1, 0], sizes = [1, 64], strides = [1, 1]} : vector<4x64xf32> to vector<1x64xf32>
    %15 = vector.extract_strided_slice %12 {offsets = [2, 0], sizes = [1, 64], strides = [1, 1]} : vector<4x64xf32> to vector<1x64xf32>
    %16 = vector.extract_strided_slice %12 {offsets = [3, 0], sizes = [1, 64], strides = [1, 1]} : vector<4x64xf32> to vector<1x64xf32>
    %17 = tpu.iota {dimensions = array<i32: 0>} : vector<8x1xi32>
    %c8_i32 = arith.constant 8 : i32
    %c0_i32 = arith.constant 0 : i32
    %18 = arith.cmpi eq, %c8_i32, %c0_i32 : i32
    %c1_i32 = arith.constant 1 : i32
    %19 = arith.select %18, %c1_i32, %c8_i32 : i32
    %20 = vector.broadcast %19 : i32 to vector<8x1xi32>
    %21 = arith.remsi %17, %20 : vector<8x1xi32>
    %c0_i32_12 = arith.constant 0 : i32
    %22 = vector.broadcast %c0_i32_12 : i32 to vector<8x1xi32>
    %23 = arith.cmpi ne, %21, %22 : vector<8x1xi32>
    %c0_i32_13 = arith.constant 0 : i32
    %24 = vector.broadcast %c0_i32_13 : i32 to vector<8x1xi32>
    %25 = arith.cmpi slt, %21, %24 : vector<8x1xi32>
    %c0_i32_14 = arith.constant 0 : i32
    %26 = arith.cmpi slt, %19, %c0_i32_14 : i32
    %27 = vector.broadcast %26 : i1 to vector<8x1xi1>
    %28 = vector.broadcast %27 : vector<8x1xi1> to vector<8x1xi1>
    %29 = arith.xori %25, %28 : vector<8x1xi1>
    %30 = arith.andi %29, %23 : vector<8x1xi1>
    %31 = vector.broadcast %19 : i32 to vector<8x1xi32>
    %32 = arith.addi %21, %31 : vector<8x1xi32>
    %33 = arith.select %30, %32, %21 : vector<8x1xi1>, vector<8x1xi32>
    %c0_i32_15 = arith.constant 0 : i32
    %34 = vector.broadcast %c0_i32_15 : i32 to vector<8x1xi32>
    %35 = arith.cmpi eq, %33, %34 : vector<8x1xi32>
    %cst_16 = arith.constant 0.000000e+00 : f32
    %36 = vector.broadcast %cst_16 : f32 to vector<16x128xf32>
    %37 = arith.maximumf %10, %36 : vector<16x128xf32>
    %c0_17 = arith.constant 0 : index
    %c0_18 = arith.constant 0 : index
    %c0_19 = arith.constant 0 : index
    %38 = vector.load %arg5[%c0_17, %c0_18, %c0_19] : memref<1x128x64xf32, #tpu.memory_space<vmem>>, vector<1x128x64xf32>
    %39 = vector.shape_cast %38 : vector<1x128x64xf32> to vector<128x64xf32>
    %cst_20 = arith.constant dense<0.000000e+00> : vector<16x64xf32>
    %40 = tpu.matmul %37, %39, %cst_20 {dimension_numbers = #tpu.dot_dimension_numbers<[1], [0], [0], [1], [0, 0, 1, 1], [], []>} : vector<16x128xf32>, vector<128x64xf32>, vector<16x64xf32> -> vector<16x64xf32>
    %c0_21 = arith.constant 0 : index
    %c0_22 = arith.constant 0 : index
    %41 = vector.load %arg11[%c0_21, %c0_22] : memref<16x64xf32, #tpu.memory_space<vmem>>, vector<16x64xf32>
    tpu.vector_store %arg11[%c0_21, %c0_22], %40 {strides = array<i32>} : memref<16x64xf32, #tpu.memory_space<vmem>>, vector<16x64xf32>,
    %c0_23 = arith.constant 0 : index
    %c0_24 = arith.constant 0 : index
    %42 = tpu.strided_load %arg11[%c0_23, %c0_24] {strides = array<i32: 2, 1>} : memref<16x64xf32, #tpu.memory_space<vmem>>, vector<8x64xf32>
    %c1 = arith.constant 1 : index
    %c0_25 = arith.constant 0 : index
    %43 = tpu.strided_load %arg11[%c1, %c0_25] {strides = array<i32: 2, 1>} : memref<16x64xf32, #tpu.memory_space<vmem>>, vector<8x64xf32>
    %c1_i32_26 = arith.constant 1 : i32
    %44 = tpu.dynamic_rotate %43 by %c1_i32_26 dim 0 : vector<8x64xf32>, i32 -> vector<8x64xf32>
    %cst_27 = arith.constant 0.000000e+00 : f32
    %45 = vector.shape_cast %35 : vector<8x1xi1> to vector<8x1xi1>
    %46 = vector.broadcast %45 : vector<8x1xi1> to vector<8x64xi1>
    %47 = vector.broadcast %cst_27 : f32 to vector<8x64xf32>
    %48 = arith.select %46, %47, %44 : vector<8x64xi1>, vector<8x64xf32>
    %49 = tpu.concatenate %48, %42, %43 in 1 : vector<8x64xf32>, vector<8x64xf32>, vector<8x64xf32> -> vector<8x192xf32>
    %c0_28 = arith.constant 0 : index
    %c0_29 = arith.constant 0 : index
    %c0_30 = arith.constant 0 : index
    %50 = vector.load %arg6[%c0_28, %c0_29, %c0_30] : memref<1x192x64xf32, #tpu.memory_space<vmem>>, vector<1x192x64xf32>
    %51 = vector.shape_cast %50 : vector<1x192x64xf32> to vector<192x64xf32>
    %cst_31 = arith.constant dense<0.000000e+00> : vector<8x64xf32>
    %52 = tpu.matmul %49, %51, %cst_31 {dimension_numbers = #tpu.dot_dimension_numbers<[1], [0], [0], [1], [0, 0, 1, 1], [], []>} : vector<8x192xf32>, vector<192x64xf32>, vector<8x64xf32> -> vector<8x64xf32>
    %53 = vector.broadcast %13 : vector<1x64xf32> to vector<8x64xf32>
    %54 = arith.addf %52, %53 : vector<8x64xf32>
    %cst_32 = arith.constant 0.000000e+00 : f32
    %55 = vector.broadcast %cst_32 : f32 to vector<8x64xf32>
    %56 = arith.maximumf %54, %55 : vector<8x64xf32>
    %c0_33 = arith.constant 0 : index
    %c0_34 = arith.constant 0 : index
    %c0_35 = arith.constant 0 : index
    %57 = vector.load %arg7[%c0_33, %c0_34, %c0_35] : memref<1x64x64xf32, #tpu.memory_space<vmem>>, vector<1x64x64xf32>
    %58 = vector.shape_cast %57 : vector<1x64x64xf32> to vector<64x64xf32>
    %cst_36 = arith.constant dense<0.000000e+00> : vector<8x64xf32>
    %59 = tpu.matmul %56, %58, %cst_36 {dimension_numbers = #tpu.dot_dimension_numbers<[1], [0], [0], [1], [0, 0, 1, 1], [], []>} : vector<8x64xf32>, vector<64x64xf32>, vector<8x64xf32> -> vector<8x64xf32>
    %60 = vector.broadcast %14 : vector<1x64xf32> to vector<8x64xf32>
    %61 = arith.addf %59, %60 : vector<8x64xf32>
    %c0_37 = arith.constant 0 : index
    %c0_38 = arith.constant 0 : index
    %62 = vector.load %arg9[%c0_37, %c0_38] : memref<128x192xf32, #tpu.memory_space<vmem>>, vector<128x192xf32>
    %cst_39 = arith.constant dense<0.000000e+00> : vector<16x192xf32>
    %63 = tpu.matmul %10, %62, %cst_39 {dimension_numbers = #tpu.dot_dimension_numbers<[1], [0], [0], [1], [0, 0, 1, 1], [], []>} : vector<16x128xf32>, vector<128x192xf32>, vector<16x192xf32> -> vector<16x192xf32>
    %64 = tpu.iota {dimensions = array<i32: 1>} : vector<1x64xi32>
    %c8_i32_40 = arith.constant 8 : i32
    %65 = vector.broadcast %c8_i32_40 : i32 to vector<1x64xi32>
    %66 = arith.cmpi slt, %64, %65 : vector<1x64xi32>
    %67 = vector.extract_strided_slice %63 {offsets = [0, 0], sizes = [16, 64], strides = [1, 1]} : vector<16x192xf32> to vector<16x64xf32>
    %cst_41 = arith.constant -1.000000e+30 : f32
    %68 = vector.shape_cast %66 : vector<1x64xi1> to vector<1x64xi1>
    %69 = vector.broadcast %68 : vector<1x64xi1> to vector<16x64xi1>
    %70 = vector.broadcast %cst_41 : f32 to vector<16x64xf32>
    %71 = arith.select %69, %70, %67 : vector<16x64xi1>, vector<16x64xf32>
    %72 = vector.extract_strided_slice %63 {offsets = [0, 64], sizes = [16, 64], strides = [1, 1]} : vector<16x192xf32> to vector<16x64xf32>
    %73 = arith.maximumf %71, %72 : vector<16x64xf32>
    %74 = vector.extract_strided_slice %63 {offsets = [0, 128], sizes = [16, 64], strides = [1, 1]} : vector<16x192xf32> to vector<16x64xf32>
    %75 = arith.maximumf %73, %74 : vector<16x64xf32>
    %c0_42 = arith.constant 0 : index
    %c0_43 = arith.constant 0 : index
    %76 = vector.load %arg11[%c0_42, %c0_43] : memref<16x64xf32, #tpu.memory_space<vmem>>, vector<16x64xf32>
    tpu.vector_store %arg11[%c0_42, %c0_43], %75 {strides = array<i32>} : memref<16x64xf32, #tpu.memory_space<vmem>>, vector<16x64xf32>,
    %c0_44 = arith.constant 0 : index
    %c0_45 = arith.constant 0 : index
    %77 = tpu.strided_load %arg11[%c0_44, %c0_45] {strides = array<i32: 2, 1>} : memref<16x64xf32, #tpu.memory_space<vmem>>, vector<8x64xf32>
    %c1_46 = arith.constant 1 : index
    %c0_47 = arith.constant 0 : index
    %78 = tpu.strided_load %arg11[%c1_46, %c0_47] {strides = array<i32: 2, 1>} : memref<16x64xf32, #tpu.memory_space<vmem>>, vector<8x64xf32>
    %c1_i32_48 = arith.constant 1 : i32
    %79 = tpu.dynamic_rotate %78 by %c1_i32_48 dim 0 : vector<8x64xf32>, i32 -> vector<8x64xf32>
    %cst_49 = arith.constant -1.000000e+30 : f32
    %80 = vector.shape_cast %35 : vector<8x1xi1> to vector<8x1xi1>
    %81 = vector.broadcast %80 : vector<8x1xi1> to vector<8x64xi1>
    %82 = vector.broadcast %cst_49 : f32 to vector<8x64xf32>
    %83 = arith.select %81, %82, %79 : vector<8x64xi1>, vector<8x64xf32>
    %84 = arith.maximumf %83, %77 : vector<8x64xf32>
    %85 = arith.maximumf %84, %78 : vector<8x64xf32>
    %86 = vector.broadcast %15 : vector<1x64xf32> to vector<8x64xf32>
    %87 = arith.mulf %85, %86 : vector<8x64xf32>
    %88 = vector.broadcast %16 : vector<1x64xf32> to vector<8x64xf32>
    %89 = arith.addf %87, %88 : vector<8x64xf32>
    %90 = tpu.concatenate %61, %89 in 1 : vector<8x64xf32>, vector<8x64xf32> -> vector<8x128xf32>
    %c0_50 = arith.constant 0 : index
    %c0_51 = arith.constant 0 : index
    %c0_52 = arith.constant 0 : index
    %91 = vector.load %arg10[%c0_50, %c0_51, %c0_52] : memref<1x8x128xf32, #tpu.memory_space<vmem>>, vector<1x8x128xf32>
    %92 = vector.shape_cast %91 : vector<1x8x128xf32> to vector<8x128xf32>
    %93 = vector.shape_cast %90 : vector<8x128xf32> to vector<1x8x128xf32>
    tpu.vector_store %arg10[%c0_50, %c0_51, %c0_52], %93 {strides = array<i32>} : memref<1x8x128xf32, #tpu.memory_space<vmem>>, vector<1x8x128xf32>,
    return
  }
  func.func @transform_0(%arg0: i32, %arg1: i32) -> (i32, i32, i32) {
    %c0_i32 = arith.constant 0 : i32
    %c0_i32_0 = arith.constant 0 : i32
    return %arg0, %arg1, %c0_i32 : i32, i32, i32
  }
  func.func @transform_1(%arg0: i32, %arg1: i32) -> (i32, i32, i32) {
    %c0_i32 = arith.constant 0 : i32
    %c0_i32_0 = arith.constant 0 : i32
    %c0_i32_1 = arith.constant 0 : i32
    return %arg0, %c0_i32, %c0_i32_0 : i32, i32, i32
  }
  func.func @transform_2(%arg0: i32, %arg1: i32) -> (i32, i32, i32) {
    %c0_i32 = arith.constant 0 : i32
    %c0_i32_0 = arith.constant 0 : i32
    %c0_i32_1 = arith.constant 0 : i32
    return %arg0, %c0_i32, %c0_i32_0 : i32, i32, i32
  }
  func.func @transform_3(%arg0: i32, %arg1: i32) -> (i32, i32, i32) {
    %c0_i32 = arith.constant 0 : i32
    %c0_i32_0 = arith.constant 0 : i32
    %c0_i32_1 = arith.constant 0 : i32
    return %arg0, %c0_i32, %c0_i32_0 : i32, i32, i32
  }
  func.func @transform_4(%arg0: i32, %arg1: i32) -> (i32, i32, i32) {
    %c0_i32 = arith.constant 0 : i32
    %c0_i32_0 = arith.constant 0 : i32
    %c0_i32_1 = arith.constant 0 : i32
    return %arg0, %c0_i32, %c0_i32_0 : i32, i32, i32
  }
  func.func @transform_5(%arg0: i32, %arg1: i32) -> (i32, i32, i32) {
    %c0_i32 = arith.constant 0 : i32
    %c0_i32_0 = arith.constant 0 : i32
    %c0_i32_1 = arith.constant 0 : i32
    return %arg0, %c0_i32, %c0_i32_0 : i32, i32, i32
  }
  func.func @transform_6(%arg0: i32, %arg1: i32) -> (i32, i32, i32) {
    %c0_i32 = arith.constant 0 : i32
    %c0_i32_0 = arith.constant 0 : i32
    %c0_i32_1 = arith.constant 0 : i32
    return %arg0, %c0_i32, %c0_i32_0 : i32, i32, i32
  }
  func.func @transform_7(%arg0: i32, %arg1: i32) -> (i32, i32) {
    %c0_i32 = arith.constant 0 : i32
    %c0_i32_0 = arith.constant 0 : i32
    %c0_i32_1 = arith.constant 0 : i32
    return %c0_i32, %c0_i32_0 : i32, i32
  }
  func.func @transform_8(%arg0: i32, %arg1: i32) -> (i32, i32, i32) {
    %c0_i32 = arith.constant 0 : i32
    %c0_i32_0 = arith.constant 0 : i32
    return %arg0, %arg1, %c0_i32 : i32, i32, i32
  }
}

</mosaic_0001>

<llo_original>
// kernel: gdas_reduction_cell_apply.1
$region0: #{gdas_reduction_cell_apply.1}
  #allocation0 [shape = 'u32[]', space=smem, size = 0x4, offset = 0x4, fixed_abs, tag = 'smem constant byte address 0x4 - core index']
  #allocation1 [shape = 'u32[144,128]{1,0:T(1,128)}', space=vmem, size = 0x12000, scoped, tag = 'internal scratch']
  #allocation2 [shape = 'f32[16,64]{1,0:T(8,128)}', space=vmem, size = 0x2000, scoped, tag = 'scratch operand']
  %s0 = inlined_call_operand.vmem [shape: f32[2,32,128], index: 0, kind: input, shape index: {}]
  %s1 = inlined_call_operand.vmem [shape: f32[2,128,128], index: 1, kind: input, shape index: {}]
  %s2 = inlined_call_operand.vmem [shape: f32[2,1,128], index: 2, kind: input, shape index: {}]
  %s3 = inlined_call_operand.vmem [shape: f32[2,128,64], index: 3, kind: input, shape index: {}]
  %s4 = inlined_call_operand.vmem [shape: f32[2,192,64], index: 4, kind: input, shape index: {}]
  %s5 = inlined_call_operand.vmem [shape: f32[2,64,64], index: 5, kind: input, shape index: {}]
  %s6 = inlined_call_operand.vmem [shape: f32[2,4,64], index: 6, kind: input, shape index: {}]
  %s7 = inlined_call_operand.vmem [shape: f32[128,192], index: 7, kind: input, shape index: {}]
  %s8 = inlined_call_operand.vmem [shape: f32[2,16,128], index: 8, kind: output, shape index: {}]
  %s9 = sld [smem:[#allocation0]]
  $region65: #{gdas_reduction_cell_apply.1} parent=0
    _
  %s11 = ssub.s32 1, %s9
  %s12 = scalar_select 0, %s11, %s9
  loop: start=0, step=1, limit=6
  $region2: #{gdas_reduction_cell_apply.1} parent=0 // loop_pre_header
    _
  $region3: #{gdas_reduction_cell_apply.1} parent=0 // loop_header
    %s14 = sphi 0, %s18
    %p15 = scmp.ge.s32.totalorder %s14, 6
    %s21 = sphi 0, %s33
    %s22 = sphi 0, %s29
    %s23 = sphi 0, %s21
    %s24 = sphi 0, %s22
    %s25 = sphi 0, %s23
    %s26 = sphi 0, %s24
    %s38 = sphi 0, %s40
    %s41 = sphi 0, %s38
    %s42 = sphi 0, %s41
    %s58 = sphi 0, %s42
    %s64 = sphi 0, %s66
    %s67 = sphi 0, %s64
    %s68 = sphi 0, %s67
    %s84 = sphi 0, %s68
    %s90 = sphi 0, %s92
    %s93 = sphi 0, %s90
    %s94 = sphi 0, %s93
    %s110 = sphi 0, %s94
    %s116 = sphi 0, %s118
    %s119 = sphi 0, %s116
    %s120 = sphi 0, %s119
    %s136 = sphi 0, %s120
    %s142 = sphi 0, %s144
    %s145 = sphi 0, %s142
    %s146 = sphi 0, %s145
    %s162 = sphi 0, %s146
    %s168 = sphi 0, %s170
    %s171 = sphi 0, %s168
    %s172 = sphi 0, %s171
    %s188 = sphi 0, %s172
    %s194 = sphi 0, %s196
    %s197 = sphi 0, %s194
    %s198 = sphi 0, %s197
    %s214 = sphi 0, %s198
    %s218 = sphi 0, %s218
    %s220 = sphi 0, %s218
    %s221 = sphi 0, %s220
    %s235 = sphi 0, %s221
    %s243 = sphi 0, %s245
    %s246 = sphi 0, %s243
    %s247 = sphi 0, %s246
    %s263 = sphi 0, %s247
  $region4: #{gdas_reduction_cell_apply.1} parent=0 // loop_header_branch
    %17 = sbr.rel (%p15) target = $region8
  $region5: #{gdas_reduction_cell_apply.1} parent=0 // loop_body
    %s19 = ssub.s32 %s14, 1
    %s20 = ssub.s32 %s14, 2
    %s27 = sadd.s32 1, %s22
    %p28 = scmp.ge.s32.totalorder %s27, 2
    %s29 = scalar_select %p28, 0, %s27
    %s30 = sadd.s32 1, %s21
    %s31 = scalar_select %p28, %s30, %s21
    %p32 = scmp.ge.s32.totalorder %s31, 2
    %s33 = scalar_select %p32, 0, %s31
    %s34 = ssub.s32 %s21, %s33
    %s35 = ssub.s32 %s22, %s29
    %s36 = sor.u32 %s34, %s35
    %p37 = scmp.eq.s32.totalorder %s36, 0
    %s39 = sadd.s32 %s38, 1
    %s40 = scalar_select %p37, %s38, %s39
    %p43 = pneg %p37
    %p44 = scmp.eq.s32.totalorder %s14, 3
    %p45 = por %p43, %p44
    %p46 = scmp.ne.s32.totalorder %s38, %s41
    %p47 = scmp.eq.s32.totalorder %s14, 0
    %p48 = por %p46, %p47
    %p49 = scmp.ne.s32.totalorder %s38, %s41
    %p50 = scmp.eq.s32.totalorder %s19, 3
    %p51 = por %p49, %p50
    %p52 = scmp.ne.s32.totalorder %s41, %s42
    %p53 = scmp.eq.s32.totalorder %s19, 0
    %p54 = por %p52, %p53
    %p55 = scmp.ne.s32.totalorder %s41, %s42
    %p56 = scmp.eq.s32.totalorder %s20, 3
    %p57 = por %p55, %p56
    %p59 = scmp.ne.s32.totalorder %s42, %s58
    %p60 = scmp.eq.s32.totalorder %s20, 0
    %p61 = por %p59, %p60
    %s62 = ssub.s32 %s21, %s33
    %p63 = scmp.eq.s32.totalorder %s62, 0
    %s65 = sadd.s32 %s64, 1
    %s66 = scalar_select %p63, %s64, %s65
    %p69 = pneg %p63
    %p70 = scmp.eq.s32.totalorder %s14, 3
    %p71 = por %p69, %p70
    %p72 = scmp.ne.s32.totalorder %s64, %s67
    %p73 = scmp.eq.s32.totalorder %s14, 0
    %p74 = por %p72, %p73
    %p75 = scmp.ne.s32.totalorder %s64, %s67
    %p76 = scmp.eq.s32.totalorder %s19, 3
    %p77 = por %p75, %p76
    %p78 = scmp.ne.s32.totalorder %s67, %s68
    %p79 = scmp.eq.s32.totalorder %s19, 0
    %p80 = por %p78, %p79
    %p81 = scmp.ne.s32.totalorder %s67, %s68
    %p82 = scmp.eq.s32.totalorder %s20, 3
    %p83 = por %p81, %p82
    %p85 = scmp.ne.s32.totalorder %s68, %s84
    %p86 = scmp.eq.s32.totalorder %s20, 0
    %p87 = por %p85, %p86
    %s88 = ssub.s32 %s21, %s33
    %p89 = scmp.eq.s32.totalorder %s88, 0
    %s91 = sadd.s32 %s90, 1
    %s92 = scalar_select %p89, %s90, %s91
    %p95 = pneg %p89
    %p96 = scmp.eq.s32.totalorder %s14, 3
    %p97 = por %p95, %p96
    %p98 = scmp.ne.s32.totalorder %s90, %s93
    %p99 = scmp.eq.s32.totalorder %s14, 0
    %p100 = por %p98, %p99
    %p101 = scmp.ne.s32.totalorder %s90, %s93
    %p102 = scmp.eq.s32.totalorder %s19, 3
    %p103 = por %p101, %p102
    %p104 = scmp.ne.s32.totalorder %s93, %s94
    %p105 = scmp.eq.s32.totalorder %s19, 0
    %p106 = por %p104, %p105
    %p107 = scmp.ne.s32.totalorder %s93, %s94
    %p108 = scmp.eq.s32.totalorder %s20, 3
    %p109 = por %p107, %p108
    %p111 = scmp.ne.s32.totalorder %s94, %s110
    %p112 = scmp.eq.s32.totalorder %s20, 0
    %p113 = por %p111, %p112
    %s114 = ssub.s32 %s21, %s33
    %p115 = scmp.eq.s32.totalorder %s114, 0
    %s117 = sadd.s32 %s116, 1
    %s118 = scalar_select %p115, %s116, %s117
    %p121 = pneg %p115
    %p122 = scmp.eq.s32.totalorder %s14, 3
    %p123 = por %p121, %p122
    %p124 = scmp.ne.s32.totalorder %s116, %s119
    %p125 = scmp.eq.s32.totalorder %s14, 0
    %p126 = por %p124, %p125
    %p127 = scmp.ne.s32.totalorder %s116, %s119
    %p128 = scmp.eq.s32.totalorder %s19, 3
    %p129 = por %p127, %p128
    %p130 = scmp.ne.s32.totalorder %s119, %s120
    %p131 = scmp.eq.s32.totalorder %s19, 0
    %p132 = por %p130, %p131
    %p133 = scmp.ne.s32.totalorder %s119, %s120
    %p134 = scmp.eq.s32.totalorder %s20, 3
    %p135 = por %p133, %p134
    %p137 = scmp.ne.s32.totalorder %s120, %s136
    %p138 = scmp.eq.s32.totalorder %s20, 0
    %p139 = por %p137, %p138
    %s140 = ssub.s32 %s21, %s33
    %p141 = scmp.eq.s32.totalorder %s140, 0
    %s143 = sadd.s32 %s142, 1
    %s144 = scalar_select %p141, %s142, %s143
    %p147 = pneg %p141
    %p148 = scmp.eq.s32.totalorder %s14, 3
    %p149 = por %p147, %p148
    %p150 = scmp.ne.s32.totalorder %s142, %s145
    %p151 = scmp.eq.s32.totalorder %s14, 0
    %p152 = por %p150, %p151
    %p153 = scmp.ne.s32.totalorder %s142, %s145
    %p154 = scmp.eq.s32.totalorder %s19, 3
    %p155 = por %p153, %p154
    %p156 = scmp.ne.s32.totalorder %s145, %s146
    %p157 = scmp.eq.s32.totalorder %s19, 0
    %p158 = por %p156, %p157
    %p159 = scmp.ne.s32.totalorder %s145, %s146
    %p160 = scmp.eq.s32.totalorder %s20, 3
    %p161 = por %p159, %p160
    %p163 = scmp.ne.s32.totalorder %s146, %s162
    %p164 = scmp.eq.s32.totalorder %s20, 0
    %p165 = por %p163, %p164
    %s166 = ssub.s32 %s21, %s33
    %p167 = scmp.eq.s32.totalorder %s166, 0
    %s169 = sadd.s32 %s168, 1
    %s170 = scalar_select %p167, %s168, %s169
    %p173 = pneg %p167
    %p174 = scmp.eq.s32.totalorder %s14, 3
    %p175 = por %p173, %p174
    %p176 = scmp.ne.s32.totalorder %s168, %s171
    %p177 = scmp.eq.s32.totalorder %s14, 0
    %p178 = por %p176, %p177
    %p179 = scmp.ne.s32.totalorder %s168, %s171
    %p180 = scmp.eq.s32.totalorder %s19, 3
    %p181 = por %p179, %p180
    %p182 = scmp.ne.s32.totalorder %s171, %s172
    %p183 = scmp.eq.s32.totalorder %s19, 0
    %p184 = por %p182, %p183
    %p185 = scmp.ne.s32.totalorder %s171, %s172
    %p186 = scmp.eq.s32.totalorder %s20, 3
    %p187 = por %p185, %p186
    %p189 = scmp.ne.s32.totalorder %s172, %s188
    %p190 = scmp.eq.s32.totalorder %s20, 0
    %p191 = por %p189, %p190
    %s192 = ssub.s32 %s21, %s33
    %p193 = scmp.eq.s32.totalorder %s192, 0
    %s195 = sadd.s32 %s194, 1
    %s196 = scalar_select %p193, %s194, %s195
    %p199 = pneg %p193
    %p200 = scmp.eq.s32.totalorder %s14, 3
    %p201 = por %p199, %p200
    %p202 = scmp.ne.s32.totalorder %s194, %s197
    %p203 = scmp.eq.s32.totalorder %s14, 0
    %p204 = por %p202, %p203
    %p205 = scmp.ne.s32.totalorder %s194, %s197
    %p206 = scmp.eq.s32.totalorder %s19, 3
    %p207 = por %p205, %p206
    %p208 = scmp.ne.s32.totalorder %s197, %s198
    %p209 = scmp.eq.s32.totalorder %s19, 0
    %p210 = por %p208, %p209
    %p211 = scmp.ne.s32.totalorder %s197, %s198
    %p212 = scmp.eq.s32.totalorder %s20, 3
    %p213 = por %p211, %p212
    %p215 = scmp.ne.s32.totalorder %s198, %s214
    %p216 = scmp.eq.s32.totalorder %s20, 0
    %p217 = por %p215, %p216
    %s219 = sadd.s32 %s218, 1
    %p222 = scmp.eq.s32.totalorder %s14, 3
    %p223 = scmp.ne.s32.totalorder %s218, %s220
    %p224 = scmp.eq.s32.totalorder %s14, 0
    %p225 = por %p223, %p224
    %p226 = scmp.ne.s32.totalorder %s218, %s220
    %p227 = scmp.eq.s32.totalorder %s19, 3
    %p228 = por %p226, %p227
    %p229 = scmp.ne.s32.totalorder %s220, %s221
    %p230 = scmp.eq.s32.totalorder %s19, 0
    %p231 = por %p229, %p230
    %p232 = scmp.ne.s32.totalorder %s220, %s221
    %p233 = scmp.eq.s32.totalorder %s20, 3
    %p234 = por %p232, %p233
    %p236 = scmp.ne.s32.totalorder %s221, %s235
    %p237 = scmp.eq.s32.totalorder %s20, 0
    %p238 = por %p236, %p237
    %s239 = ssub.s32 %s21, %s33
    %s240 = ssub.s32 %s22, %s29
    %s241 = sor.u32 %s239, %s240
    %p242 = scmp.eq.s32.totalorder %s241, 0
    %s244 = sadd.s32 %s243, 1
    %s245 = scalar_select %p242, %s243, %s244
    %p248 = pneg %p242
    %p249 = scmp.eq.s32.totalorder %s14, 3
    %p250 = por %p248, %p249
    %p251 = scmp.ne.s32.totalorder %s243, %s246
    %p252 = scmp.eq.s32.totalorder %s14, 0
    %p253 = por %p251, %p252
    %p254 = scmp.ne.s32.totalorder %s243, %s246
    %p255 = scmp.eq.s32.totalorder %s19, 3
    %p256 = por %p254, %p255
    %p257 = scmp.ne.s32.totalorder %s246, %s247
    %p258 = scmp.eq.s32.totalorder %s19, 0
    %p259 = por %p257, %p258
    %p260 = scmp.ne.s32.totalorder %s246, %s247
    %p261 = scmp.eq.s32.totalorder %s20, 3
    %p262 = por %p260, %p261
    %p264 = scmp.ne.s32.totalorder %s247, %s263
    %p265 = scmp.eq.s32.totalorder %s20, 0
    %p266 = por %p264, %p265
    %p267 = scmp.le.s32.totalorder 1, %s14
    %p268 = scmp.lt.s32.totalorder %s14, 5
    %p269 = pnand %p267, %p268
    %p270 = pneg %p269
    // Predicated region
    $region9: #{gdas_reduction_cell_apply.1} parent=5 // pred_check
      _
    $region10: #{gdas_reduction_cell_apply.1} parent=5 // pred_check_branch
      %272 = sbr.rel (%p269) target = $region12
    $region11: #{gdas_reduction_cell_apply.1} parent=5 // pred_region
      %s273 = ssub.s32 %s14, 1
      // Predicated region
      $region13: #{gdas_reduction_cell_apply.1} parent=11 // pred_check
        %p274 = pneg %p231
      $region14: #{gdas_reduction_cell_apply.1} parent=11 // pred_check_branch
        %276 = sbr.rel (%p274) target = $region16
      $region15: #{gdas_reduction_cell_apply.1} parent=11 // pred_region
        _
      $region16: #{gdas_reduction_cell_apply.1} parent=11 // pred_fallthru
        _
    $region12: #{gdas_reduction_cell_apply.1} parent=5 // pred_fallthru
      _
    %p277 = scmp.lt.s32.totalorder %s14, 4
    // Predicated region
    $region17: #{gdas_reduction_cell_apply.1} parent=5 // pred_check
      %p278 = pneg %p277
    $region18: #{gdas_reduction_cell_apply.1} parent=5 // pred_check_branch
      %280 = sbr.rel (%p278) target = $region20
    $region19: #{gdas_reduction_cell_apply.1} parent=5 // pred_region
      // Predicated region
      $region21: #{gdas_reduction_cell_apply.1} parent=19 // pred_check
        %p281 = pneg %p48
      $region22: #{gdas_reduction_cell_apply.1} parent=19 // pred_check_branch
        %283 = sbr.rel (%p281) target = $region24
      $region23: #{gdas_reduction_cell_apply.1} parent=19 // pred_region
        %s284 = smul.u32 2, %s22
        %p285 = scmp.lt.s32.totalorder %s21, 1
        %s286 = scalar_select %p285, %s21, 1
        %p287 = scmp.lt.s32.totalorder %s284, 3
        %s288 = scalar_select %p287, %s284, 3
        %s289 = smul.addr %s286, 4
        %s290 = sadd.s32 %s288, %s289
        %s291 = smul.addr %s290, 8
        %s292 = scalar_lea.vmem %s0, %s291
        %s293 = smul.u32 2, %s22
      $region24: #{gdas_reduction_cell_apply.1} parent=19 // pred_fallthru
        _
      // Predicated region
      $region25: #{gdas_reduction_cell_apply.1} parent=19 // pred_check
        %p294 = pneg %p74
      $region26: #{gdas_reduction_cell_apply.1} parent=19 // pred_check_branch
        %296 = sbr.rel (%p294) target = $region28
      $region27: #{gdas_reduction_cell_apply.1} parent=19 // pred_region
        %p297 = scmp.lt.s32.totalorder %s21, 1
        %s298 = scalar_select %p297, %s21, 1
        %s299 = smul.addr %s298, 16
        %s300 = smul.addr %s299, 8
        %s301 = scalar_lea.vmem %s1, %s300
      $region28: #{gdas_reduction_cell_apply.1} parent=19 // pred_fallthru
        _
      // Predicated region
      $region29: #{gdas_reduction_cell_apply.1} parent=19 // pred_check
        %p302 = pneg %p100
      $region30: #{gdas_reduction_cell_apply.1} parent=19 // pred_check_branch
        %304 = sbr.rel (%p302) target = $region32
      $region31: #{gdas_reduction_cell_apply.1} parent=19 // pred_region
        %p305 = scmp.lt.s32.totalorder %s21, 1
        %s306 = scalar_select %p305, %s21, 1
        %s307 = scalar_lea.vmem %s2, %s306
      $region32: #{gdas_reduction_cell_apply.1} parent=19 // pred_fallthru
        _
      // Predicated region
      $region33: #{gdas_reduction_cell_apply.1} parent=19 // pred_check
        %p308 = pneg %p126
      $region34: #{gdas_reduction_cell_apply.1} parent=19 // pred_check_branch
        %310 = sbr.rel (%p308) target = $region36
      $region35: #{gdas_reduction_cell_apply.1} parent=19 // pred_region
        %p311 = scmp.lt.s32.totalorder %s21, 1
        %s312 = scalar_select %p311, %s21, 1
        %s313 = smul.addr %s312, 16
        %s314 = smul.addr %s313, 8
        %s315 = scalar_lea.vmem %s3, %s314
      $region36: #{gdas_reduction_cell_apply.1} parent=19 // pred_fallthru
        _
      // Predicated region
      $region37: #{gdas_reduction_cell_apply.1} parent=19 // pred_check
        %p316 = pneg %p152
      $region38: #{gdas_reduction_cell_apply.1} parent=19 // pred_check_branch
        %318 = sbr.rel (%p316) target = $region40
      $region39: #{gdas_reduction_cell_apply.1} parent=19 // pred_region
        %p319 = scmp.lt.s32.totalorder %s21, 1
        %s320 = scalar_select %p319, %s21, 1
        %s321 = smul.addr %s320, 24
        %s322 = smul.addr %s321, 8
        %s323 = scalar_lea.vmem %s4, %s322
      $region40: #{gdas_reduction_cell_apply.1} parent=19 // pred_fallthru
        _
      // Predicated region
      $region41: #{gdas_reduction_cell_apply.1} parent=19 // pred_check
        %p324 = pneg %p178
      $region42: #{gdas_reduction_cell_apply.1} parent=19 // pred_check_branch
        %326 = sbr.rel (%p324) target = $region44
      $region43: #{gdas_reduction_cell_apply.1} parent=19 // pred_region
        %p327 = scmp.lt.s32.totalorder %s21, 1
        %s328 = scalar_select %p327, %s21, 1
        %s329 = smul.addr %s328, 8
        %s330 = smul.addr %s329, 8
        %s331 = scalar_lea.vmem %s5, %s330
      $region44: #{gdas_reduction_cell_apply.1} parent=19 // pred_fallthru
        _
      // Predicated region
      $region45: #{gdas_reduction_cell_apply.1} parent=19 // pred_check
        %p332 = pneg %p204
      $region46: #{gdas_reduction_cell_apply.1} parent=19 // pred_check_branch
        %334 = sbr.rel (%p332) target = $region48
      $region47: #{gdas_reduction_cell_apply.1} parent=19 // pred_region
        %p335 = scmp.lt.s32.totalorder %s21, 1
        %s336 = scalar_select %p335, %s21, 1
        %s337 = smul.addr %s336, 4
        %s338 = scalar_lea.vmem %s6, %s337
      $region48: #{gdas_reduction_cell_apply.1} parent=19 // pred_fallthru
        _
    $region20: #{gdas_reduction_cell_apply.1} parent=5 // pred_fallthru
      _
    %p339 = scmp.le.s32.totalorder 1, %s14
    %p340 = scmp.lt.s32.totalorder %s14, 5
    %p341 = pnand %p339, %p340
    %p342 = pneg %p341
    // Predicated region
    $region49: #{gdas_reduction_cell_apply.1} parent=5 // pred_check
      _
    $region50: #{gdas_reduction_cell_apply.1} parent=5 // pred_check_branch
      %344 = sbr.rel (%p341) target = $region52
    $region51: #{gdas_reduction_cell_apply.1} parent=5 // pred_region
      %s345 = ssub.s32 %s14, 1
      %s346 = smul.u32 2, %s24
      %p347 = scmp.lt.s32.totalorder %s23, 1
      %s348 = scalar_select %p347, %s23, 1
      %p349 = scmp.lt.s32.totalorder %s346, 3
      %s350 = scalar_select %p349, %s346, 3
      %s351 = smul.addr %s348, 4
      %s352 = sadd.s32 %s350, %s351
      %s353 = smul.addr %s352, 8
      %s354 = scalar_lea.vmem %s0, %s353
      %p355 = pneg %p54
      %p356 = pneg %p51
      %p357 = scmp.lt.s32.totalorder %s23, 1
      %s358 = scalar_select %p357, %s23, 1
      %s359 = smul.addr %s358, 16
      %s360 = smul.addr %s359, 8
      %s361 = scalar_lea.vmem %s1, %s360
      %p362 = pneg %p80
      %p363 = pneg %p77
      %p364 = scmp.lt.s32.totalorder %s23, 1
      %s365 = scalar_select %p364, %s23, 1
      %s366 = scalar_lea.vmem %s2, %s365
      %p367 = pneg %p106
      %p368 = pneg %p103
      %p369 = scmp.lt.s32.totalorder %s23, 1
      %s370 = scalar_select %p369, %s23, 1
      %s371 = smul.addr %s370, 16
      %s372 = smul.addr %s371, 8
      %s373 = scalar_lea.vmem %s3, %s372
      %p374 = pneg %p132
      %p375 = pneg %p129
      %p376 = scmp.lt.s32.totalorder %s23, 1
      %s377 = scalar_select %p376, %s23, 1
      %s378 = smul.addr %s377, 24
      %s379 = smul.addr %s378, 8
      %s380 = scalar_lea.vmem %s4, %s379
      %p381 = pneg %p158
      %p382 = pneg %p155
      %p383 = scmp.lt.s32.totalorder %s23, 1
      %s384 = scalar_select %p383, %s23, 1
      %s385 = smul.addr %s384, 8
      %s386 = smul.addr %s385, 8
      %s387 = scalar_lea.vmem %s5, %s386
      %p388 = pneg %p184
      %p389 = pneg %p181
      %p390 = scmp.lt.s32.totalorder %s23, 1
      %s391 = scalar_select %p390, %s23, 1
      %s392 = smul.addr %s391, 4
      %s393 = scalar_lea.vmem %s6, %s392
      %p394 = pneg %p210
      %p395 = pneg %p207
      %p396 = pneg %p231
      %p397 = pneg %p228
      %p398 = pneg %p259
      %p399 = pneg %p256
      %p400 = scmp.lt.s32.totalorder %s23, 1
      %s401 = scalar_select %p400, %s23, 1
      %p402 = scmp.lt.s32.totalorder %s24, 1
      %s403 = scalar_select %p402, %s24, 1
      %s404 = smul.addr %s401, 2
      %s405 = sadd.s32 %s403, %s404
      %s406 = smul.addr %s405, 8
      %s407 = scalar_lea.vmem %s8, %s406
      %s408 = smul.u32 2, %s24
      %p409 = scmp.lt.s32.totalorder %s23, 1
      %s410 = scalar_select %p409, %s23, 1
      %p411 = scmp.lt.s32.totalorder %s408, 3
      %s412 = scalar_select %p411, %s408, 3
      %s413 = smul.addr %s410, 4
      %s414 = sadd.s32 %s412, %s413
      %s415 = smul.addr %s414, 8
      %s416 = scalar_lea.vmem %s0, %s415
      %s417 = smul.u32 2, %s24
      %p418 = scmp.lt.s32.totalorder %s23, 1
      %s419 = scalar_select %p418, %s23, 1
      %s420 = smul.addr %s419, 16
      %s421 = smul.addr %s420, 8
      %s422 = scalar_lea.vmem %s1, %s421
      %p423 = scmp.lt.s32.totalorder %s23, 1
      %s424 = scalar_select %p423, %s23, 1
      %s425 = scalar_lea.vmem %s2, %s424
      %p426 = scmp.lt.s32.totalorder %s23, 1
      %s427 = scalar_select %p426, %s23, 1
      %s428 = smul.addr %s427, 16
      %s429 = smul.addr %s428, 8
      %s430 = scalar_lea.vmem %s3, %s429
      %p431 = scmp.lt.s32.totalorder %s23, 1
      %s432 = scalar_select %p431, %s23, 1
      %s433 = smul.addr %s432, 24
      %s434 = smul.addr %s433, 8
      %s435 = scalar_lea.vmem %s4, %s434
      %p436 = scmp.lt.s32.totalorder %s23, 1
      %s437 = scalar_select %p436, %s23, 1
      %s438 = smul.addr %s437, 8
      %s439 = smul.addr %s438, 8
      %s440 = scalar_lea.vmem %s5, %s439
      %p441 = scmp.lt.s32.totalorder %s23, 1
      %s442 = scalar_select %p441, %s23, 1
      %s443 = smul.addr %s442, 4
      %s444 = scalar_lea.vmem %s6, %s443
      %p445 = scmp.lt.s32.totalorder %s23, 1
      %s446 = scalar_select %p445, %s23, 1
      %p447 = scmp.lt.s32.totalorder %s24, 1
      %s448 = scalar_select %p447, %s24, 1
      %s449 = smul.addr %s446, 2
      %s450 = sadd.s32 %s448, %s449
      %s451 = smul.addr %s450, 8
      %s452 = scalar_lea.vmem %s8, %s451
      %v453 = vld [vmem:[%s416] sm:$0xff]
      %v454 = vld [vmem:[%s416 + $0x8] sm:$0xff]
      %v455 = vmax.f32 %v453, 0.0
      %v456 = vmax.f32 %v454, 0.0
      %v457 = vld [vmem:[%s422] sm:$0xff]
      %v458 = vld [vmem:[%s422 + $0x8] sm:$0xff]
      %v459 = vld [vmem:[%s422 + $0x10] sm:$0xff]
      %v460 = vld [vmem:[%s422 + $0x18] sm:$0xff]
      %v461 = vld [vmem:[%s422 + $0x20] sm:$0xff]
      %v462 = vld [vmem:[%s422 + $0x28] sm:$0xff]
      %v463 = vld [vmem:[%s422 + $0x30] sm:$0xff]
      %v464 = vld [vmem:[%s422 + $0x38] sm:$0xff]
      %v465 = vld [vmem:[%s422 + $0x40] sm:$0xff]
      %v466 = vld [vmem:[%s422 + $0x48] sm:$0xff]
      %v467 = vld [vmem:[%s422 + $0x50] sm:$0xff]
      %v468 = vld [vmem:[%s422 + $0x58] sm:$0xff]
      %v469 = vld [vmem:[%s422 + $0x60] sm:$0xff]
      %v470 = vld [vmem:[%s422 + $0x68] sm:$0xff]
      %v471 = vld [vmem:[%s422 + $0x70] sm:$0xff]
      %v472 = vld [vmem:[%s422 + $0x78] sm:$0xff]
      %v473 = vld [vmem:[%s425] sm:$0x1]
      %v475 = vlaneseq
      %v476 = vshrl.u32 %v475, 7
      %v477 = vsub.s32 0, %v476
      %v478 = vrot.slane %v473, %v477
      %480 = vmatprep.subr.mxu0 0.0
      %481 = vmatpush1.msra.mxu0 %v457
      %482 = vmatprep.subr.mxu0 0.0
      %483 = vmatpush1.msra.mxu0 %v458
      %484 = vmatprep.subr.mxu0 0.0
      %485 = vmatpush1.msra.mxu0 %v459
      %486 = vmatprep.subr.mxu0 0.0
      %487 = vmatpush1.msra.mxu0 %v460
      %488 = vmatprep.subr.mxu0 0.0
      %489 = vmatpush1.msra.mxu0 %v461
      %490 = vmatprep.subr.mxu0 0.0
      %491 = vmatpush1.msra.mxu0 %v462
      %492 = vmatprep.subr.mxu0 0.0
      %493 = vmatpush1.msra.mxu0 %v463
      %494 = vmatprep.subr.mxu0 0.0
      %495 = vmatpush1.msra.mxu0 %v464
      %496 = vmatprep.subr.mxu0 0.0
      %497 = vmatpush1.msra.mxu0 %v465
      %498 = vmatprep.subr.mxu0 0.0
      %499 = vmatpush1.msra.mxu0 %v466
      %500 = vmatprep.subr.mxu0 0.0
      %501 = vmatpush1.msra.mxu0 %v467
      %502 = vmatprep.subr.mxu0 0.0
      %503 = vmatpush1.msra.mxu0 %v468
      %504 = vmatprep.subr.mxu0 0.0
      %505 = vmatpush1.msra.mxu0 %v469
      %506 = vmatprep.subr.mxu0 0.0
      %507 = vmatpush1.msra.mxu0 %v470
      %508 = vmatprep.subr.mxu0 0.0
      %509 = vmatpush1.msra.mxu0 %v471
      %510 = vmatprep.subr.mxu0 0.0
      %511 = vmatpush1.msra.mxu0 %v472
      %512 = vmatprep.subr.mxu0 0.0
      %513 = vmatpush1.msra.mxu0 0.0
      %514 = vmatprep.subr.mxu0 0.0
      %515 = vmatpush1.msra.mxu0 0.0
      %516 = vmatprep.subr.mxu0 0.0
      %517 = vmatpush1.msra.mxu0 0.0
      %518 = vmatprep.subr.mxu0 0.0
      %519 = vmatpush1.msra.mxu0 0.0
      %520 = vmatprep.subr.mxu0 0.0
      %521 = vmatpush1.msra.mxu0 0.0
      %522 = vmatprep.subr.mxu0 0.0
      %523 = vmatpush1.msra.mxu0 0.0
      %524 = vmatprep.subr.mxu0 0.0
      %525 = vmatpush1.msra.mxu0 0.0
      %526 = vmatprep.subr.mxu0 0.0
      %527 = vmatpush1.msra.mxu0 0.0
      %528 = vmatprep.subr.mxu0 0.0
      %529 = vmatpush1.msra.mxu0 0.0
      %530 = vmatprep.subr.mxu0 0.0
      %531 = vmatpush1.msra.mxu0 0.0
      %532 = vmatprep.subr.mxu0 0.0
      %533 = vmatpush1.msra.mxu0 0.0
      %534 = vmatprep.subr.mxu0 0.0
      %535 = vmatpush1.msra.mxu0 0.0
      %536 = vmatprep.subr.mxu0 0.0
      %537 = vmatpush1.msra.mxu0 0.0
      %538 = vmatprep.subr.mxu0 0.0
      %539 = vmatpush1.msra.mxu0 0.0
      %540 = vmatprep.subr.mxu0 0.0
      %541 = vmatpush1.msra.mxu0 0.0
      %542 = vmatprep.subr.mxu0 0.0
      %543 = vmatpush1.msra.mxu0 0.0
      %544 = vmatprep.mubr.f32.mxu0 0.0
      %545 = vmatmul.mubr.f32.gmra.mrb[0].mxu0 %v455
      %v546 = vpop.f32.mrb[0].mxu0
      %v547 = vadd.f32 %v478, %v546
      %v548 = vpop.f32.mrb[0].mxu0
      %549 = vmatprep.mubr.f32.mxu0 0.0
      %550 = vmatmul.mubr.f32.gmra.mrb[0].mxu0 %v456
      %v551 = vpop.f32.mrb[0].mxu0
      %v552 = vadd.f32 %v478, %v551
      %v553 = vpop.f32.mrb[0].mxu0
      %554 = vdwg.mxu0
      %v555 = vld [vmem:[%s444] sm:$0xf]
      %v556 = vlaneseq
      %v557 = vshrl.u32 %v556, 7
      %vm558 = vcmp.lt.s32.totalorder %v557, 0
      %v559 = vsub.s32 0, %v557
      %v560 = vsel %vm558, %v559, %v557
      %v561 = vshrl.u32 %v560, 3
      %v562 = vand.u32 %v560, 7
      %v563 = vsub.s32 0, %v562
      %v564 = vsel %vm558, %v563, %v562
      %vm565 = vcmp.ne.s32.totalorder %v564, 0
      %vm566 = vcmp.lt.s32.totalorder %v564, 0
      %vm567 = vmand %vm566, %vm565
      %v568 = vadd.s32 %v564, 8
      %v569 = vsel %vm567, %v568, %v564
      %vm570 = vcmp.eq.s32.totalorder %v569, 0
      %v571 = vmax.f32 %v547, 0.0
      %v572 = vmax.f32 %v552, 0.0
      %v573 = vld [vmem:[%s430] sm:$0xff]
      %v574 = vld [vmem:[%s430 + $0x8] sm:$0xff]
      %v575 = vld [vmem:[%s430 + $0x10] sm:$0xff]
      %v576 = vld [vmem:[%s430 + $0x18] sm:$0xff]
      %v577 = vld [vmem:[%s430 + $0x20] sm:$0xff]
      %v578 = vld [vmem:[%s430 + $0x28] sm:$0xff]
      %v579 = vld [vmem:[%s430 + $0x30] sm:$0xff]
      %v580 = vld [vmem:[%s430 + $0x38] sm:$0xff]
      %v581 = vld [vmem:[%s430 + $0x40] sm:$0xff]
      %v582 = vld [vmem:[%s430 + $0x48] sm:$0xff]
      %v583 = vld [vmem:[%s430 + $0x50] sm:$0xff]
      %v584 = vld [vmem:[%s430 + $0x58] sm:$0xff]
      %v585 = vld [vmem:[%s430 + $0x60] sm:$0xff]
      %v586 = vld [vmem:[%s430 + $0x68] sm:$0xff]
      %v587 = vld [vmem:[%s430 + $0x70] sm:$0xff]
      %v588 = vld [vmem:[%s430 + $0x78] sm:$0xff]
      %589 = vmatprep.subr.mxu0 0.0
      %590 = vmatpush1.msra.mxu0 %v573
      %591 = vmatprep.subr.mxu0 0.0
      %592 = vmatpush1.msra.mxu0 %v574
      %593 = vmatprep.subr.mxu0 0.0
      %594 = vmatpush1.msra.mxu0 %v575
      %595 = vmatprep.subr.mxu0 0.0
      %596 = vmatpush1.msra.mxu0 %v576
      %597 = vmatprep.subr.mxu0 0.0
      %598 = vmatpush1.msra.mxu0 %v577
      %599 = vmatprep.subr.mxu0 0.0
      %600 = vmatpush1.msra.mxu0 %v578
      %601 = vmatprep.subr.mxu0 0.0
      %602 = vmatpush1.msra.mxu0 %v579
      %603 = vmatprep.subr.mxu0 0.0
      %604 = vmatpush1.msra.mxu0 %v580
      %605 = vmatprep.subr.mxu0 0.0
      %606 = vmatpush1.msra.mxu0 %v581
      %607 = vmatprep.subr.mxu0 0.0
      %608 = vmatpush1.msra.mxu0 %v582
      %609 = vmatprep.subr.mxu0 0.0
      %610 = vmatpush1.msra.mxu0 %v583
      %611 = vmatprep.subr.mxu0 0.0
      %612 = vmatpush1.msra.mxu0 %v584
      %613 = vmatprep.subr.mxu0 0.0
      %614 = vmatpush1.msra.mxu0 %v585
      %615 = vmatprep.subr.mxu0 0.0
      %616 = vmatpush1.msra.mxu0 %v586
      %617 = vmatprep.subr.mxu0 0.0
      %618 = vmatpush1.msra.mxu0 %v587
      %619 = vmatprep.subr.mxu0 0.0
      %620 = vmatpush1.msra.mxu0 %v588
      %621 = vmatprep.subr.mxu0 0.0
      %622 = vmatpush1.msra.mxu0 0.0
      %623 = vmatprep.subr.mxu0 0.0
      %624 = vmatpush1.msra.mxu0 0.0
      %625 = vmatprep.subr.mxu0 0.0
      %626 = vmatpush1.msra.mxu0 0.0
      %627 = vmatprep.subr.mxu0 0.0
      %628 = vmatpush1.msra.mxu0 0.0
      %629 = vmatprep.subr.mxu0 0.0
      %630 = vmatpush1.msra.mxu0 0.0
      %631 = vmatprep.subr.mxu0 0.0
      %632 = vmatpush1.msra.mxu0 0.0
      %633 = vmatprep.subr.mxu0 0.0
      %634 = vmatpush1.msra.mxu0 0.0
      %635 = vmatprep.subr.mxu0 0.0
      %636 = vmatpush1.msra.mxu0 0.0
      %637 = vmatprep.subr.mxu0 0.0
      %638 = vmatpush1.msra.mxu0 0.0
      %639 = vmatprep.subr.mxu0 0.0
      %640 = vmatpush1.msra.mxu0 0.0
      %641 = vmatprep.subr.mxu0 0.0
      %642 = vmatpush1.msra.mxu0 0.0
      %643 = vmatprep.subr.mxu0 0.0
      %644 = vmatpush1.msra.mxu0 0.0
      %645 = vmatprep.subr.mxu0 0.0
      %646 = vmatpush1.msra.mxu0 0.0
      %647 = vmatprep.subr.mxu0 0.0
      %648 = vmatpush1.msra.mxu0 0.0
      %649 = vmatprep.subr.mxu0 0.0
      %650 = vmatpush1.msra.mxu0 0.0
      %651 = vmatprep.subr.mxu0 0.0
      %652 = vmatpush1.msra.mxu0 0.0
      %653 = vmatprep.mubr.f32.mxu0 0.0
      %654 = vmatmul.mubr.f32.gmra.mrb[0].mxu0 %v571
      %v655 = vpop.f32.mrb[0].mxu0
      %v656 = vadd.f32 0.0, %v655
      %v657 = vpop.f32.mrb[0].mxu0
      %658 = vmatprep.mubr.f32.mxu0 0.0
      %659 = vmatmul.mubr.f32.gmra.mrb[0].mxu0 %v572
      %v660 = vpop.f32.mrb[0].mxu0
      %v661 = vadd.f32 0.0, %v660
      %v662 = vpop.f32.mrb[0].mxu0
      %663 = vdwg.mxu0
      %vm664 = vcmask 523264
      %665 = vst.msk [vmem:[#allocation2] sm:$0xff] %vm664, %v656
      %666 = vst.msk [vmem:[#allocation2 + $0x8] sm:$0xff] %vm664, %v661
      %v667 = vld [vmem:[#allocation2] ss:$2 sm:$0xff]
      %s668 = scalar_lea.vmem [#allocation2], 1
      %v669 = vld [vmem:[%s668] ss:$2 sm:$0xff]
      %v670 = vrot.slane %v669, 7
      %v671 = vsel %vm570, 1, 0
      %vm672 = vcmp.eq.s32.totalorder %v671, 1
      %v673 = vsel %vm672, 0.0, %v670
      %675 = vrot.lane.b32.xlu0 %v667, 64
      %v676 = vpop.permute.xlu0 %675
      %v678 = vsel %vm664, %v673, %v676
      %v679 = vld [vmem:[%s435] sm:$0xff]
      %v680 = vld [vmem:[%s435 + $0x8] sm:$0xff]
      %v681 = vld [vmem:[%s435 + $0x10] sm:$0xff]
      %v682 = vld [vmem:[%s435 + $0x18] sm:$0xff]
      %v683 = vld [vmem:[%s435 + $0x20] sm:$0xff]
      %v684 = vld [vmem:[%s435 + $0x28] sm:$0xff]
      %v685 = vld [vmem:[%s435 + $0x30] sm:$0xff]
      %v686 = vld [vmem:[%s435 + $0x38] sm:$0xff]
      %v687 = vld [vmem:[%s435 + $0x40] sm:$0xff]
      %v688 = vld [vmem:[%s435 + $0x48] sm:$0xff]
      %v689 = vld [vmem:[%s435 + $0x50] sm:$0xff]
      %v690 = vld [vmem:[%s435 + $0x58] sm:$0xff]
      %v691 = vld [vmem:[%s435 + $0x60] sm:$0xff]
      %v692 = vld [vmem:[%s435 + $0x68] sm:$0xff]
      %v693 = vld [vmem:[%s435 + $0x70] sm:$0xff]
      %v694 = vld [vmem:[%s435 + $0x78] sm:$0xff]
      %v695 = vld [vmem:[%s435 + $0x80] sm:$0xff]
      %v696 = vld [vmem:[%s435 + $0x88] sm:$0xff]
      %v697 = vld [vmem:[%s435 + $0x90] sm:$0xff]
      %v698 = vld [vmem:[%s435 + $0x98] sm:$0xff]
      %v699 = vld [vmem:[%s435 + $0xa0] sm:$0xff]
      %v700 = vld [vmem:[%s435 + $0xa8] sm:$0xff]
      %v701 = vld [vmem:[%s435 + $0xb0] sm:$0xff]
      %v702 = vld [vmem:[%s435 + $0xb8] sm:$0xff]
      %v703 = vlaneseq
      %v704 = vshrl.u32 %v703, 7
      %v705 = vsub.s32 0, %v704
      %v706 = vrot.slane %v555, %v705
      %v708 = vsel %vm664, %v669, 0
      %710 = vmatprep.subr.mxu0 0.0
      %711 = vmatpush1.msra.mxu0 %v679
      %712 = vmatprep.subr.mxu0 0.0
      %713 = vmatpush1.msra.mxu0 %v680
      %714 = vmatprep.subr.mxu0 0.0
      %715 = vmatpush1.msra.mxu0 %v681
      %716 = vmatprep.subr.mxu0 0.0
      %717 = vmatpush1.msra.mxu0 %v682
      %718 = vmatprep.subr.mxu0 0.0
      %719 = vmatpush1.msra.mxu0 %v683
      %720 = vmatprep.subr.mxu0 0.0
      %721 = vmatpush1.msra.mxu0 %v684
      %722 = vmatprep.subr.mxu0 0.0
      %723 = vmatpush1.msra.mxu0 %v685
      %724 = vmatprep.subr.mxu0 0.0
      %725 = vmatpush1.msra.mxu0 %v686
      %726 = vmatprep.subr.mxu0 0.0
      %727 = vmatpush1.msra.mxu0 %v687
      %728 = vmatprep.subr.mxu0 0.0
      %729 = vmatpush1.msra.mxu0 %v688
      %730 = vmatprep.subr.mxu0 0.0
      %731 = vmatpush1.msra.mxu0 %v689
      %732 = vmatprep.subr.mxu0 0.0
      %733 = vmatpush1.msra.mxu0 %v690
      %734 = vmatprep.subr.mxu0 0.0
      %735 = vmatpush1.msra.mxu0 %v691
      %736 = vmatprep.subr.mxu0 0.0
      %737 = vmatpush1.msra.mxu0 %v692
      %738 = vmatprep.subr.mxu0 0.0
      %739 = vmatpush1.msra.mxu0 %v693
      %740 = vmatprep.subr.mxu0 0.0
      %741 = vmatpush1.msra.mxu0 %v694
      %742 = vmatprep.subr.mxu0 0.0
      %743 = vmatpush1.msra.mxu0 %v695
      %744 = vmatprep.subr.mxu0 0.0
      %745 = vmatpush1.msra.mxu0 %v696
      %746 = vmatprep.subr.mxu0 0.0
      %747 = vmatpush1.msra.mxu0 %v697
      %748 = vmatprep.subr.mxu0 0.0
      %749 = vmatpush1.msra.mxu0 %v698
      %750 = vmatprep.subr.mxu0 0.0
      %751 = vmatpush1.msra.mxu0 %v699
      %752 = vmatprep.subr.mxu0 0.0
      %753 = vmatpush1.msra.mxu0 %v700
      %754 = vmatprep.subr.mxu0 0.0
      %755 = vmatpush1.msra.mxu0 %v701
      %756 = vmatprep.subr.mxu0 0.0
      %757 = vmatpush1.msra.mxu0 %v702
      %758 = vmatprep.subr.mxu0 0.0
      %759 = vmatpush1.msra.mxu0 0.0
      %760 = vmatprep.subr.mxu0 0.0
      %761 = vmatpush1.msra.mxu0 0.0
      %762 = vmatprep.subr.mxu0 0.0
      %763 = vmatpush1.msra.mxu0 0.0
      %764 = vmatprep.subr.mxu0 0.0
      %765 = vmatpush1.msra.mxu0 0.0
      %766 = vmatprep.subr.mxu0 0.0
      %767 = vmatpush1.msra.mxu0 0.0
      %768 = vmatprep.subr.mxu0 0.0
      %769 = vmatpush1.msra.mxu0 0.0
      %770 = vmatprep.subr.mxu0 0.0
      %771 = vmatpush1.msra.mxu0 0.0
      %772 = vmatprep.subr.mxu0 0.0
      %773 = vmatpush1.msra.mxu0 0.0
      %774 = vmatprep.mubr.f32.mxu0 %v708
      %775 = vmatmul.mubr.f32.gmra.mrb[0].mxu0 %v678
      %v776 = vpop.f32.mrb[0].mxu0
      %v777 = vadd.f32 %v706, %v776
      %v778 = vpop.f32.mrb[0].mxu0
      %779 = vdwg.mxu0
      %v780 = vmax.f32 %v777, 0.0
      %v781 = vld [vmem:[%s440] sm:$0xff]
      %v782 = vld [vmem:[%s440 + $0x8] sm:$0xff]
      %v783 = vld [vmem:[%s440 + $0x10] sm:$0xff]
      %v784 = vld [vmem:[%s440 + $0x18] sm:$0xff]
      %v785 = vld [vmem:[%s440 + $0x20] sm:$0xff]
      %v786 = vld [vmem:[%s440 + $0x28] sm:$0xff]
      %v787 = vld [vmem:[%s440 + $0x30] sm:$0xff]
      %v788 = vld [vmem:[%s440 + $0x38] sm:$0xff]
      %v789 = vlaneseq
      %v790 = vshrl.u32 %v789, 7
      %v791 = vsub.s32 1, %v790
      %v792 = vrot.slane %v555, %v791
      %v794 = vsel %vm664, %v780, 0
      %796 = vmatprep.subr.mxu0 0.0
      %797 = vmatpush1.msra.mxu0 %v781
      %798 = vmatprep.subr.mxu0 0.0
      %799 = vmatpush1.msra.mxu0 %v782
      %800 = vmatprep.subr.mxu0 0.0
      %801 = vmatpush1.msra.mxu0 %v783
      %802 = vmatprep.subr.mxu0 0.0
      %803 = vmatpush1.msra.mxu0 %v784
      %804 = vmatprep.subr.mxu0 0.0
      %805 = vmatpush1.msra.mxu0 %v785
      %806 = vmatprep.subr.mxu0 0.0
      %807 = vmatpush1.msra.mxu0 %v786
      %808 = vmatprep.subr.mxu0 0.0
      %809 = vmatpush1.msra.mxu0 %v787
      %810 = vmatprep.subr.mxu0 0.0
      %811 = vmatpush1.msra.mxu0 %v788
      %812 = vmatprep.subr.mxu0 0.0
      %813 = vmatpush1.msra.mxu0 0.0
      %814 = vmatprep.subr.mxu0 0.0
      %815 = vmatpush1.msra.mxu0 0.0
      %816 = vmatprep.subr.mxu0 0.0
      %817 = vmatpush1.msra.mxu0 0.0
      %818 = vmatprep.subr.mxu0 0.0
      %819 = vmatpush1.msra.mxu0 0.0
      %820 = vmatprep.subr.mxu0 0.0
      %821 = vmatpush1.msra.mxu0 0.0
      %822 = vmatprep.subr.mxu0 0.0
      %823 = vmatpush1.msra.mxu0 0.0
      %824 = vmatprep.subr.mxu0 0.0
      %825 = vmatpush1.msra.mxu0 0.0
      %826 = vmatprep.subr.mxu0 0.0
      %827 = vmatpush1.msra.mxu0 0.0
      %828 = vmatprep.subr.mxu0 0.0
      %829 = vmatpush1.msra.mxu0 0.0
      %830 = vmatprep.subr.mxu0 0.0
      %831 = vmatpush1.msra.mxu0 0.0
      %832 = vmatprep.subr.mxu0 0.0
      %833 = vmatpush1.msra.mxu0 0.0
      %834 = vmatprep.subr.mxu0 0.0
      %835 = vmatpush1.msra.mxu0 0.0
      %836 = vmatprep.subr.mxu0 0.0
      %837 = vmatpush1.msra.mxu0 0.0
      %838 = vmatprep.subr.mxu0 0.0
      %839 = vmatpush1.msra.mxu0 0.0
      %840 = vmatprep.subr.mxu0 0.0
      %841 = vmatpush1.msra.mxu0 0.0
      %842 = vmatprep.subr.mxu0 0.0
      %843 = vmatpush1.msra.mxu0 0.0
      %844 = vmatprep.subr.mxu0 0.0
      %845 = vmatpush1.msra.mxu0 0.0
      %846 = vmatprep.subr.mxu0 0.0
      %847 = vmatpush1.msra.mxu0 0.0
      %848 = vmatprep.subr.mxu0 0.0
      %849 = vmatpush1.msra.mxu0 0.0
      %850 = vmatprep.subr.mxu0 0.0
      %851 = vmatpush1.msra.mxu0 0.0
      %852 = vmatprep.subr.mxu0 0.0
      %853 = vmatpush1.msra.mxu0 0.0
      %854 = vmatprep.subr.mxu0 0.0
      %855 = vmatpush1.msra.mxu0 0.0
      %856 = vmatprep.subr.mxu0 0.0
      %857 = vmatpush1.msra.mxu0 0.0
      %858 = vmatprep.subr.mxu0 0.0
      %859 = vmatpush1.msra.mxu0 0.0
      %860 = vmatprep.mubr.f32.mxu0 0.0
      %861 = vmatmul.mubr.f32.gmra.mrb[0].mxu0 %v794
      %v862 = vpop.f32.mrb[0].mxu0
      %v863 = vadd.f32 %v792, %v862
      %v864 = vpop.f32.mrb[0].mxu0
      %865 = vdwg.mxu0
      %v866 = vld [vmem:[%s7] sm:$0xff]
      %v867 = vld [vmem:[%s7 + $0x8] sm:$0xff]
      %v868 = vld [vmem:[%s7 + $0x10] sm:$0xff]
      %v869 = vld [vmem:[%s7 + $0x18] sm:$0xff]
      %v870 = vld [vmem:[%s7 + $0x20] sm:$0xff]
      %v871 = vld [vmem:[%s7 + $0x28] sm:$0xff]
      %v872 = vld [vmem:[%s7 + $0x30] sm:$0xff]
      %v873 = vld [vmem:[%s7 + $0x38] sm:$0xff]
      %v874 = vld [vmem:[%s7 + $0x40] sm:$0xff]
      %v875 = vld [vmem:[%s7 + $0x48] sm:$0xff]
      %v876 = vld [vmem:[%s7 + $0x50] sm:$0xff]
      %v877 = vld [vmem:[%s7 + $0x58] sm:$0xff]
      %v878 = vld [vmem:[%s7 + $0x60] sm:$0xff]
      %v879 = vld [vmem:[%s7 + $0x68] sm:$0xff]
      %v880 = vld [vmem:[%s7 + $0x70] sm:$0xff]
      %v881 = vld [vmem:[%s7 + $0x78] sm:$0xff]
      %v882 = vld [vmem:[%s7 + $0x80] sm:$0xff]
      %v883 = vld [vmem:[%s7 + $0x88] sm:$0xff]
      %v884 = vld [vmem:[%s7 + $0x90] sm:$0xff]
      %v885 = vld [vmem:[%s7 + $0x98] sm:$0xff]
      %v886 = vld [vmem:[%s7 + $0xa0] sm:$0xff]
      %v887 = vld [vmem:[%s7 + $0xa8] sm:$0xff]
      %v888 = vld [vmem:[%s7 + $0xb0] sm:$0xff]
      %v889 = vld [vmem:[%s7 + $0xb8] sm:$0xff]
      %v890 = vld [vmem:[%s7 + $0xc0] sm:$0xff]
      %v891 = vld [vmem:[%s7 + $0xc8] sm:$0xff]
      %v892 = vld [vmem:[%s7 + $0xd0] sm:$0xff]
      %v893 = vld [vmem:[%s7 + $0xd8] sm:$0xff]
      %v894 = vld [vmem:[%s7 + $0xe0] sm:$0xff]
      %v895 = vld [vmem:[%s7 + $0xe8] sm:$0xff]
      %v896 = vld [vmem:[%s7 + $0xf0] sm:$0xff]
      %v897 = vld [vmem:[%s7 + $0xf8] sm:$0xff]
      %898 = vmatprep.subr.mxu0 %v867
      %899 = vmatpush1.msra.mxu0 %v866
      %900 = vmatprep.subr.mxu0 %v869
      %901 = vmatpush1.msra.mxu0 %v868
      %902 = vmatprep.subr.mxu0 %v871
      %903 = vmatpush1.msra.mxu0 %v870
      %904 = vmatprep.subr.mxu0 %v873
      %905 = vmatpush1.msra.mxu0 %v872
      %906 = vmatprep.subr.mxu0 %v875
      %907 = vmatpush1.msra.mxu0 %v874
      %908 = vmatprep.subr.mxu0 %v877
      %909 = vmatpush1.msra.mxu0 %v876
      %910 = vmatprep.subr.mxu0 %v879
      %911 = vmatpush1.msra.mxu0 %v878
      %912 = vmatprep.subr.mxu0 %v881
      %913 = vmatpush1.msra.mxu0 %v880
      %914 = vmatprep.subr.mxu0 %v883
      %915 = vmatpush1.msra.mxu0 %v882
      %916 = vmatprep.subr.mxu0 %v885
      %917 = vmatpush1.msra.mxu0 %v884
      %918 = vmatprep.subr.mxu0 %v887
      %919 = vmatpush1.msra.mxu0 %v886
      %920 = vmatprep.subr.mxu0 %v889
      %921 = vmatpush1.msra.mxu0 %v888
      %922 = vmatprep.subr.mxu0 %v891
      %923 = vmatpush1.msra.mxu0 %v890
      %924 = vmatprep.subr.mxu0 %v893
      %925 = vmatpush1.msra.mxu0 %v892
      %926 = vmatprep.subr.mxu0 %v895
      %927 = vmatpush1.msra.mxu0 %v894
      %928 = vmatprep.subr.mxu0 %v897
      %929 = vmatpush1.msra.mxu0 %v896
      %930 = vmatprep.subr.mxu0 0.0
      %931 = vmatpush1.msra.mxu0 0.0
      %932 = vmatprep.subr.mxu0 0.0
      %933 = vmatpush1.msra.mxu0 0.0
      %934 = vmatprep.subr.mxu0 0.0
      %935 = vmatpush1.msra.mxu0 0.0
      %936 = vmatprep.subr.mxu0 0.0
      %937 = vmatpush1.msra.mxu0 0.0
      %938 = vmatprep.subr.mxu0 0.0
      %939 = vmatpush1.msra.mxu0 0.0
      %940 = vmatprep.subr.mxu0 0.0
      %941 = vmatpush1.msra.mxu0 0.0
      %942 = vmatprep.subr.mxu0 0.0
      %943 = vmatpush1.msra.mxu0 0.0
      %944 = vmatprep.subr.mxu0 0.0
      %945 = vmatpush1.msra.mxu0 0.0
      %946 = vmatprep.subr.mxu0 0.0
      %947 = vmatpush1.msra.mxu0 0.0
      %948 = vmatprep.subr.mxu0 0.0
      %949 = vmatpush1.msra.mxu0 0.0
      %950 = vmatprep.subr.mxu0 0.0
      %951 = vmatpush1.msra.mxu0 0.0
      %952 = vmatprep.subr.mxu0 0.0
      %953 = vmatpush1.msra.mxu0 0.0
      %954 = vmatprep.subr.mxu0 0.0
      %955 = vmatpush1.msra.mxu0 0.0
      %956 = vmatprep.subr.mxu0 0.0
      %957 = vmatpush1.msra.mxu0 0.0
      %958 = vmatprep.subr.mxu0 0.0
      %959 = vmatpush1.msra.mxu0 0.0
      %960 = vmatprep.subr.mxu0 0.0
      %961 = vmatpush1.msra.mxu0 0.0
      %962 = vmatprep.mubr.f32.mxu0 0.0
      %963 = vmatmul.mubr.f32.gmra.mrb[0].mxu0 %v547
      %v964 = vpop.f32.mrb[0].mxu0
      %v965 = vadd.f32 0.0, %v964
      %v966 = vpop.f32.mrb[0].mxu0
      %v967 = vadd.f32 0.0, %v966
      %968 = vmatprep.mubr.f32.mxu0 0.0
      %969 = vmatmul.mubr.f32.gmra.mrb[0].mxu0 %v552
      %v970 = vpop.f32.mrb[0].mxu0
      %v971 = vadd.f32 0.0, %v970
      %v972 = vpop.f32.mrb[0].mxu0
      %v973 = vadd.f32 0.0, %v972
      %974 = vdwg.mxu0
      %v975 = vlaneseq
      %v976 = vand.u32 %v975, 127
      %vm977 = vcmp.lt.s32.totalorder %v976, 8
      %v978 = vsel %vm977, 1, 0
      %vm979 = vcmp.eq.s32.totalorder %v978, 1
      %v980 = vsel %vm979, -1e+30, %v965
      %v981 = vsel %vm979, -1e+30, %v971
      %984 = vrot.lane.b32.xlu0 %v965, 64
      %v985 = vpop.permute.xlu0 %984
      %986 = vrot.lane.b32.xlu0 %v971, 64
      %v987 = vpop.permute.xlu0 %986
      %v990 = vmax.f32 %v980, %v985
      %v991 = vmax.f32 %v981, %v987
      %v992 = vmax.f32 %v990, %v967
      %v993 = vmax.f32 %v991, %v973
      %994 = vst.msk [vmem:[#allocation2] sm:$0xff] %vm664, %v992
      %995 = vst.msk [vmem:[#allocation2 + $0x8] sm:$0xff] %vm664, %v993
      %v996 = vld [vmem:[#allocation2] ss:$2 sm:$0xff]
      %v997 = vld [vmem:[%s668] ss:$2 sm:$0xff]
      %v998 = vrot.slane %v997, 7
      %v999 = vsel %vm672, -1e+30, %v998
      %v1000 = vmax.f32 %v999, %v996
      %v1001 = vmax.f32 %v1000, %v997
      %v1002 = vlaneseq
      %v1003 = vshrl.u32 %v1002, 7
      %v1004 = vsub.s32 2, %v1003
      %v1005 = vrot.slane %v555, %v1004
      %v1006 = vmul.f32 %v1001, %v1005
      %v1007 = vlaneseq
      %v1008 = vshrl.u32 %v1007, 7
      %v1009 = vsub.s32 3, %v1008
      %v1010 = vrot.slane %v555, %v1009
      %v1011 = vadd.f32 %v1006, %v1010
      %1013 = vrot.lane.b32.xlu0 %v1011, 64
      %v1014 = vpop.permute.xlu0 %1013
      %v1016 = vsel %vm664, %v863, %v1014
      %1017 = vst [vmem:[%s452] sm:$0xff] %v1016
      %p1018 = scmp.lt.s32.totalorder %s23, 1
      %s1019 = scalar_select %p1018, %s23, 1
      %p1020 = scmp.lt.s32.totalorder %s24, 1
      %s1021 = scalar_select %p1020, %s24, 1
      %s1022 = smul.addr %s1019, 2
      %s1023 = sadd.s32 %s1021, %s1022
      %s1024 = smul.addr %s1023, 8
      %s1025 = scalar_lea.vmem %s8, %s1024
      // Predicated region
      $region53: #{gdas_reduction_cell_apply.1} parent=51 // pred_check
        %p1026 = pneg %p256
      $region54: #{gdas_reduction_cell_apply.1} parent=51 // pred_check_branch
        %1028 = sbr.rel (%p1026) target = $region56
      $region55: #{gdas_reduction_cell_apply.1} parent=51 // pred_region
        _
      $region56: #{gdas_reduction_cell_apply.1} parent=51 // pred_fallthru
        _
    $region52: #{gdas_reduction_cell_apply.1} parent=5 // pred_fallthru
      _
    %p1029 = scmp.le.s32.totalorder 2, %s14
    // Predicated region
    $region57: #{gdas_reduction_cell_apply.1} parent=5 // pred_check
      %p1030 = pneg %p1029
    $region58: #{gdas_reduction_cell_apply.1} parent=5 // pred_check_branch
      %1032 = sbr.rel (%p1030) target = $region60
    $region59: #{gdas_reduction_cell_apply.1} parent=5 // pred_region
      %s1033 = ssub.s32 %s14, 2
      // Predicated region
      $region61: #{gdas_reduction_cell_apply.1} parent=59 // pred_check
        %p1034 = pneg %p262
      $region62: #{gdas_reduction_cell_apply.1} parent=59 // pred_check_branch
        %1036 = sbr.rel (%p1034) target = $region64
      $region63: #{gdas_reduction_cell_apply.1} parent=59 // pred_region
        %p1037 = scmp.lt.s32.totalorder %s25, 1
        %s1038 = scalar_select %p1037, %s25, 1
        %p1039 = scmp.lt.s32.totalorder %s26, 1
        %s1040 = scalar_select %p1039, %s26, 1
        %s1041 = smul.addr %s1038, 2
        %s1042 = sadd.s32 %s1040, %s1041
        %s1043 = smul.addr %s1042, 8
        %s1044 = scalar_lea.vmem %s8, %s1043
      $region64: #{gdas_reduction_cell_apply.1} parent=59 // pred_fallthru
        _
    $region60: #{gdas_reduction_cell_apply.1} parent=5 // pred_fallthru
      _
  $region6: #{gdas_reduction_cell_apply.1} parent=0 // loop_footer
    %s18 = sadd.s32 1, %s14
  $region7: #{gdas_reduction_cell_apply.1} parent=0 // loop_footer_branch
    %13 = sbr.rel target = $region3
  $region8: #{gdas_reduction_cell_apply.1} parent=0 // loop_exit
    _

</llo_original>
